<compile_context>
chip_gen: v5e
topology: v5e:2x2
jax: 0.10.0
libtpu: 0.0.40
codegen_flags: <defaults>
</compile_context>

<pallas_src>
import functools
import math

import jax
import jax.numpy as jnp
from jax.experimental import pallas as pl
from jax.experimental.pallas import tpu as pltpu


# ---------------------------------------------------------------------------
# Kernel: one GraphSAGE layer, tiled over (node rows, aggregation contraction)
# ---------------------------------------------------------------------------
def sage_layer_kernel(a_ref, hk_ref, hr_ref, wcat_ref, b_ref, out_ref, acc_ref,
                      *, apply_relu):
    """Grid step (i, k):
       acc[i]  += A[i, k] @ h[k]                 (mean aggregation, f32 acc)
       at last k:
       out[i]   = concat([acc[i], h[i]]) @ Wcat + b   (+ ReLU)
    """
    k = pl.program_id(1)

    @pl.when(k == 0)
    def _():
        acc_ref[...] = jnp.zeros_like(acc_ref)

    acc_ref[...] += jnp.dot(a_ref[...], hk_ref[...],
                            preferred_element_type=jnp.float32)

    @pl.when(k == pl.num_programs(1) - 1)
    def _():
        agg = acc_ref[...].astype(hr_ref.dtype)          # bf16 for the MXU
        feats = jnp.concatenate([agg, hr_ref[...]], axis=-1)   # (tm, 2*Hp)
        out = jnp.dot(feats, wcat_ref[...],
                      preferred_element_type=jnp.float32) + b_ref[...]
        if apply_relu:
            out = jnp.maximum(out, 0.0)
        out_ref[...] = out.astype(out_ref.dtype)


def sage_layer(a, h, wcat, b, *, apply_relu, out_dtype, tm=128, tk=128):
    """One SAGEConv layer on padded, bf16 operands.

    a:    (Np, Np)  bf16   row-normalized adjacency (padded)
    h:    (Np, Hp)  bf16   node features (padded)
    wcat: (2*Hp, Hp) bf16  concat([W_l; W_r]) (padded)
    b:    (1, Hp)   f32    bias (padded)
    """
    n_p = a.shape[0]
    h_p = h.shape[1]
    grid = (n_p // tm, n_p // tk)

    flops = 2 * n_p * n_p * h_p + 2 * n_p * (2 * h_p) * h_p
    bytes_accessed = int(
        a.size * a.dtype.itemsize
        + (grid[0] + 1) * h.size * h.dtype.itemsize      # contraction + root reads
        + wcat.size * wcat.dtype.itemsize
        + b.size * b.dtype.itemsize
        + n_p * h_p * jnp.dtype(out_dtype).itemsize)

    return pl.pallas_call(
        functools.partial(sage_layer_kernel, apply_relu=apply_relu),
        out_shape=jax.ShapeDtypeStruct((n_p, h_p), out_dtype),
        grid_spec=pltpu.PrefetchScalarGridSpec(
            num_scalar_prefetch=0,
            grid=grid,
            in_specs=[
                # Adjacency tile A[i, k]
                pl.BlockSpec((tm, tk), lambda i, k: (i, k)),
                # Feature tile for the contraction: h[k]
                pl.BlockSpec((tk, h_p), lambda i, k: (k, 0)),
                # Root/self feature tile: h[i]
                pl.BlockSpec((tm, h_p), lambda i, k: (i, 0)),
                # Fused projection weights — constant index => VMEM-resident
                pl.BlockSpec((2 * h_p, h_p), lambda i, k: (0, 0)),
                # Bias — constant index => VMEM-resident
                pl.BlockSpec((1, h_p), lambda i, k: (0, 0)),
            ],
            out_specs=pl.BlockSpec((tm, h_p), lambda i, k: (i, 0)),
            scratch_shapes=[pltpu.VMEM((tm, h_p), jnp.float32)],
        ),
        compiler_params=pltpu.CompilerParams(
            dimension_semantics=("parallel", "arbitrary"),
            vmem_limit_bytes=32 * 1024 * 1024,   # safe on v5e/v6e/v7x
        ),
        cost_estimate=pl.CostEstimate(
            flops=flops, transcendentals=0, bytes_accessed=bytes_accessed),
    )(a, h, h, wcat, b)


# ---------------------------------------------------------------------------
# Host-side graph / parameter preparation
# ---------------------------------------------------------------------------
def build_mean_adjacency(edge_index, num_nodes, dtype=jnp.float32):
    """Row-normalized adjacency: A[i, j] = 1/deg_in(i) if edge j -> i."""
    src = edge_index[0]
    dst = edge_index[1]
    a = jnp.zeros((num_nodes, num_nodes), dtype=dtype)
    a = a.at[dst, src].add(jnp.ones_like(src, dtype=dtype))
    deg = a.sum(axis=1, keepdims=True)
    return a / jnp.maximum(deg, 1.0)


def _round_up(v, m):
    return (v + m - 1) // m * m


def _pad_to(arr, shape):
    pads = [(0, s - d) for d, s in zip(arr.shape, shape)]
    return jnp.pad(arr, pads)


@functools.partial(jax.jit, static_argnames=("tm", "tk"))
def gnn_forward(a, x, params, *, tm=128, tk=128):
    n, h = x.shape
    hp = _round_up(h, 128)                                   # lane-dense hidden
    n_pad = _round_up(n, (tm * tk) // math.gcd(tm, tk))      # both tiles divide

    a_p = _pad_to(a, (n_pad, n_pad)).astype(jnp.bfloat16)
    x_p = _pad_to(x, (n_pad, hp)).astype(jnp.bfloat16)

    def prep(wl, wr, b):
        wcat = jnp.concatenate(
            [_pad_to(wl, (hp, hp)), _pad_to(wr, (hp, hp))], axis=0
        ).astype(jnp.bfloat16)
        return wcat, _pad_to(b, (1, hp)).astype(jnp.float32)

    w1, b1 = prep(params["w1l"], params["w1r"], params["b1"])
    w2, b2 = prep(params["w2l"], params["w2r"], params["b2"])
    w3, b3 = prep(params["w3l"], params["w3r"], params["b3"])

    # Intermediate activations stay bf16 (half HBM traffic between layers).
    h1 = sage_layer(a_p, x_p, w1, b1, apply_relu=True,
                    out_dtype=jnp.bfloat16, tm=tm, tk=tk)
    h2 = sage_layer(a_p, h1, w2, b2, apply_relu=True,
                    out_dtype=jnp.bfloat16, tm=tm, tk=tk)
    h3 = sage_layer(a_p, h2, w3, b3, apply_relu=False,
                    out_dtype=jnp.float32, tm=tm, tk=tk)
    return h3[:n, :h]


def init_params(key, hidden):
    """Deterministic synthetic parameters (shapes match SAGEConv(hidden, hidden)).

    Weights are stored as (in, out) so y = x @ W (+ b); lin_l has bias,
    lin_r does not (PyG SAGEConv defaults).
    """
    ks = jax.random.split(key, 9)
    scale = 0.1

    def lin(k):
        return scale * jax.random.normal(k, (hidden, hidden), dtype=jnp.float32)

    return {
        "w1l": lin(ks[0]), "b1": scale * jax.random.normal(ks[1], (1, hidden), jnp.float32),
        "w1r": lin(ks[2]),
        "w2l": lin(ks[3]), "b2": scale * jax.random.normal(ks[4], (1, hidden), jnp.float32),
        "w2r": lin(ks[5]),
        "w3l": lin(ks[6]), "b3": scale * jax.random.normal(ks[7], (1, hidden), jnp.float32),
        "w3r": lin(ks[8]),
    }


def gnn_reference(a, x, params):
    """Pure-JAX f32 reference of the same forward for a correctness check."""
    def sage(h, wl, b, wr):
        return (a @ h) @ wl + b + h @ wr

    h1 = jax.nn.relu(sage(x, params["w1l"], params["b1"], params["w1r"]))
    h2 = jax.nn.relu(sage(h1, params["w2l"], params["b2"], params["w2r"]))
    return sage(h2, params["w3l"], params["b3"], params["w3r"])


if __name__ == "__main__":
    hidden = 32
    num_nodes = 200        # pads to 256 -> 2x2 grid (exercises accumulation)
    num_edges = 800

    key = jax.random.PRNGKey(0)
    k_x, k_src, k_dst, k_params = jax.random.split(key, 4)

    x = jax.random.normal(k_x, (num_nodes, hidden), dtype=jnp.float32)
    src = jax.random.randint(k_src, (num_edges,), 0, num_nodes, dtype=jnp.int32)
    dst = jax.random.randint(k_dst, (num_edges,), 0, num_nodes, dtype=jnp.int32)
    edge_index = jnp.stack([src, dst], axis=0)   # [2, E]: row0=source, row1=target

    params = init_params(k_params, hidden)

    # Static graph: build the normalized adjacency ONCE, outside the jit'd
    # forward (avoids an XLA scatter + N^2 materialization per call).
    a = jax.block_until_ready(build_mean_adjacency(edge_index, num_nodes))

    out = gnn_forward(a, x, params)
    out = jax.block_until_ready(out)

    ref = gnn_reference(a, x, params)
    assert out.shape == (num_nodes, hidden)
    max_err = float(jnp.max(jnp.abs(out - ref)))
    assert jnp.allclose(out, ref, atol=5e-2, rtol=5e-2), max_err

    print("KERNEL_OK")
</pallas_src>

<mosaic_0001>
module attributes {stable_mosaic.version = 11 : i64} {
  func.func @sage_layer_kernel(%arg0: i32, %arg1: i32, %arg2: memref<128x128xbf16, #tpu.memory_space<vmem>>, %arg3: memref<128x128xbf16, #tpu.memory_space<vmem>>, %arg4: memref<128x128xbf16, #tpu.memory_space<vmem>>, %arg5: memref<256x128xbf16, #tpu.memory_space<vmem>>, %arg6: memref<1x128xf32, #tpu.memory_space<vmem>>, %arg7: memref<128x128xbf16, #tpu.memory_space<vmem>>, %arg8: memref<128x128xf32, #tpu.memory_space<vmem>>) attributes {dimension_semantics = [#tpu.dimension_semantics<parallel>, #tpu.dimension_semantics<arbitrary>], iteration_bounds = array<i64: 2, 2>, scalar_prefetch = 0 : i64, scratch_operands = 1 : i64, tpu.core_type = #tpu.core_type<tc>, window_params = [{transform_indices = @transform_0, window_bounds = array<i64: 128, 128>}, {transform_indices = @transform_1, window_bounds = array<i64: 128, 128>}, {transform_indices = @transform_2, window_bounds = array<i64: 128, 128>}, {pipeline_mode = #tpu.pipeline_mode<synchronous>, transform_indices = @transform_3, window_bounds = array<i64: 256, 128>}, {pipeline_mode = #tpu.pipeline_mode<synchronous>, transform_indices = @transform_4, window_bounds = array<i64: 1, 128>}, {transform_indices = @transform_5, window_bounds = array<i64: 128, 128>}]} {
    %c0_i32 = arith.constant 0 : i32
    %0 = arith.cmpi eq, %arg1, %c0_i32 : i32
    %1 = arith.extui %0 : i1 to i32
    %c0_i32_0 = arith.constant 0 : i32
    %2 = arith.cmpi ne, %1, %c0_i32_0 : i32
    scf.if %2 {
      %cst_9 = arith.constant 0.000000e+00 : f32
      %12 = vector.broadcast %cst_9 : f32 to vector<128x128xf32>
      %c0_10 = arith.constant 0 : index
      %c0_11 = arith.constant 0 : index
      %13 = vector.load %arg8[%c0_10, %c0_11] : memref<128x128xf32, #tpu.memory_space<vmem>>, vector<128x128xf32>
      tpu.vector_store %arg8[%c0_10, %c0_11], %12 {strides = array<i32>} : memref<128x128xf32, #tpu.memory_space<vmem>>, vector<128x128xf32>,
    } else {
    }
    %c0 = arith.constant 0 : index
    %c0_1 = arith.constant 0 : index
    %3 = vector.load %arg8[%c0, %c0_1] : memref<128x128xf32, #tpu.memory_space<vmem>>, vector<128x128xf32>
    %c0_2 = arith.constant 0 : index
    %c0_3 = arith.constant 0 : index
    %4 = vector.load %arg2[%c0_2, %c0_3] : memref<128x128xbf16, #tpu.memory_space<vmem>>, vector<128x128xbf16>
    %c0_4 = arith.constant 0 : index
    %c0_5 = arith.constant 0 : index
    %5 = vector.load %arg3[%c0_4, %c0_5] : memref<128x128xbf16, #tpu.memory_space<vmem>>, vector<128x128xbf16>
    %cst = arith.constant dense<0.000000e+00> : vector<128x128xf32>
    %6 = tpu.matmul %4, %5, %cst {dimension_numbers = #tpu.dot_dimension_numbers<[1], [0], [0], [1], [0, 0, 1, 1], [], []>} : vector<128x128xbf16>, vector<128x128xbf16>, vector<128x128xf32> -> vector<128x128xf32>
    %7 = arith.addf %3, %6 : vector<128x128xf32>
    %c0_6 = arith.constant 0 : index
    %c0_7 = arith.constant 0 : index
    %8 = vector.load %arg8[%c0_6, %c0_7] : memref<128x128xf32, #tpu.memory_space<vmem>>, vector<128x128xf32>
    tpu.vector_store %arg8[%c0_6, %c0_7], %7 {strides = array<i32>} : memref<128x128xf32, #tpu.memory_space<vmem>>, vector<128x128xf32>,
    %c1_i32 = arith.constant 1 : i32
    %9 = arith.cmpi eq, %arg1, %c1_i32 : i32
    %10 = arith.extui %9 : i1 to i32
    %c0_i32_8 = arith.constant 0 : i32
    %11 = arith.cmpi ne, %10, %c0_i32_8 : i32
    scf.if %11 {
      %c0_9 = arith.constant 0 : index
      %c0_10 = arith.constant 0 : index
      %12 = vector.load %arg8[%c0_9, %c0_10] : memref<128x128xf32, #tpu.memory_space<vmem>>, vector<128x128xf32>
      %13 = arith.truncf %12 : vector<128x128xf32> to vector<128x128xbf16>
      %c0_11 = arith.constant 0 : index
      %c0_12 = arith.constant 0 : index
      %14 = vector.load %arg4[%c0_11, %c0_12] : memref<128x128xbf16, #tpu.memory_space<vmem>>, vector<128x128xbf16>
      %15 = tpu.concatenate %13, %14 in 1 : vector<128x128xbf16>, vector<128x128xbf16> -> vector<128x256xbf16>
      %c0_13 = arith.constant 0 : index
      %c0_14 = arith.constant 0 : index
      %16 = vector.load %arg5[%c0_13, %c0_14] : memref<256x128xbf16, #tpu.memory_space<vmem>>, vector<256x128xbf16>
      %cst_15 = arith.constant dense<0.000000e+00> : vector<128x128xf32>
      %17 = tpu.matmul %15, %16, %cst_15 {dimension_numbers = #tpu.dot_dimension_numbers<[1], [0], [0], [1], [0, 0, 1, 1], [], []>} : vector<128x256xbf16>, vector<256x128xbf16>, vector<128x128xf32> -> vector<128x128xf32>
      %c0_16 = arith.constant 0 : index
      %c0_17 = arith.constant 0 : index
      %18 = vector.load %arg6[%c0_16, %c0_17] : memref<1x128xf32, #tpu.memory_space<vmem>>, vector<1x128xf32>
      %19 = vector.broadcast %18 : vector<1x128xf32> to vector<128x128xf32>
      %20 = arith.addf %17, %19 : vector<128x128xf32>
      %cst_18 = arith.constant 0.000000e+00 : f32
      %21 = vector.broadcast %cst_18 : f32 to vector<128x128xf32>
      %22 = arith.maximumf %20, %21 : vector<128x128xf32>
      %23 = arith.truncf %22 : vector<128x128xf32> to vector<128x128xbf16>
      %c0_19 = arith.constant 0 : index
      %c0_20 = arith.constant 0 : index
      %24 = vector.load %arg7[%c0_19, %c0_20] : memref<128x128xbf16, #tpu.memory_space<vmem>>, vector<128x128xbf16>
      tpu.vector_store %arg7[%c0_19, %c0_20], %23 {strides = array<i32>} : memref<128x128xbf16, #tpu.memory_space<vmem>>, vector<128x128xbf16>,
    } else {
    }
    return
  }
  func.func @transform_0(%arg0: i32, %arg1: i32) -> (i32, i32) {
    %c0_i32 = arith.constant 0 : i32
    return %arg0, %arg1 : i32, i32
  }
  func.func @transform_1(%arg0: i32, %arg1: i32) -> (i32, i32) {
    %c0_i32 = arith.constant 0 : i32
    %c0_i32_0 = arith.constant 0 : i32
    return %arg1, %c0_i32 : i32, i32
  }
  func.func @transform_2(%arg0: i32, %arg1: i32) -> (i32, i32) {
    %c0_i32 = arith.constant 0 : i32
    %c0_i32_0 = arith.constant 0 : i32
    return %arg0, %c0_i32 : i32, i32
  }
  func.func @transform_3(%arg0: i32, %arg1: i32) -> (i32, i32) {
    %c0_i32 = arith.constant 0 : i32
    %c0_i32_0 = arith.constant 0 : i32
    %c0_i32_1 = arith.constant 0 : i32
    return %c0_i32, %c0_i32_0 : i32, i32
  }
  func.func @transform_4(%arg0: i32, %arg1: i32) -> (i32, i32) {
    %c0_i32 = arith.constant 0 : i32
    %c0_i32_0 = arith.constant 0 : i32
    %c0_i32_1 = arith.constant 0 : i32
    return %c0_i32, %c0_i32_0 : i32, i32
  }
  func.func @transform_5(%arg0: i32, %arg1: i32) -> (i32, i32) {
    %c0_i32 = arith.constant 0 : i32
    %c0_i32_0 = arith.constant 0 : i32
    return %arg0, %c0_i32 : i32, i32
  }
}

module attributes {stable_mosaic.version = 11 : i64} {
  func.func @sage_layer_kernel(%arg0: i32, %arg1: i32, %arg2: memref<128x128xbf16, #tpu.memory_space<vmem>>, %arg3: memref<128x128xbf16, #tpu.memory_space<vmem>>, %arg4: memref<128x128xbf16, #tpu.memory_space<vmem>>, %arg5: memref<256x128xbf16, #tpu.memory_space<vmem>>, %arg6: memref<1x128xf32, #tpu.memory_space<vmem>>, %arg7: memref<128x128xf32, #tpu.memory_space<vmem>>, %arg8: memref<128x128xf32, #tpu.memory_space<vmem>>) attributes {dimension_semantics = [#tpu.dimension_semantics<parallel>, #tpu.dimension_semantics<arbitrary>], iteration_bounds = array<i64: 2, 2>, scalar_prefetch = 0 : i64, scratch_operands = 1 : i64, tpu.core_type = #tpu.core_type<tc>, window_params = [{transform_indices = @transform_0, window_bounds = array<i64: 128, 128>}, {transform_indices = @transform_1, window_bounds = array<i64: 128, 128>}, {transform_indices = @transform_2, window_bounds = array<i64: 128, 128>}, {pipeline_mode = #tpu.pipeline_mode<synchronous>, transform_indices = @transform_3, window_bounds = array<i64: 256, 128>}, {pipeline_mode = #tpu.pipeline_mode<synchronous>, transform_indices = @transform_4, window_bounds = array<i64: 1, 128>}, {transform_indices = @transform_5, window_bounds = array<i64: 128, 128>}]} {
    %c0_i32 = arith.constant 0 : i32
    %0 = arith.cmpi eq, %arg1, %c0_i32 : i32
    %1 = arith.extui %0 : i1 to i32
    %c0_i32_0 = arith.constant 0 : i32
    %2 = arith.cmpi ne, %1, %c0_i32_0 : i32
    scf.if %2 {
      %cst_9 = arith.constant 0.000000e+00 : f32
      %12 = vector.broadcast %cst_9 : f32 to vector<128x128xf32>
      %c0_10 = arith.constant 0 : index
      %c0_11 = arith.constant 0 : index
      %13 = vector.load %arg8[%c0_10, %c0_11] : memref<128x128xf32, #tpu.memory_space<vmem>>, vector<128x128xf32>
      tpu.vector_store %arg8[%c0_10, %c0_11], %12 {strides = array<i32>} : memref<128x128xf32, #tpu.memory_space<vmem>>, vector<128x128xf32>,
    } else {
    }
    %c0 = arith.constant 0 : index
    %c0_1 = arith.constant 0 : index
    %3 = vector.load %arg8[%c0, %c0_1] : memref<128x128xf32, #tpu.memory_space<vmem>>, vector<128x128xf32>
    %c0_2 = arith.constant 0 : index
    %c0_3 = arith.constant 0 : index
    %4 = vector.load %arg2[%c0_2, %c0_3] : memref<128x128xbf16, #tpu.memory_space<vmem>>, vector<128x128xbf16>
    %c0_4 = arith.constant 0 : index
    %c0_5 = arith.constant 0 : index
    %5 = vector.load %arg3[%c0_4, %c0_5] : memref<128x128xbf16, #tpu.memory_space<vmem>>, vector<128x128xbf16>
    %cst = arith.constant dense<0.000000e+00> : vector<128x128xf32>
    %6 = tpu.matmul %4, %5, %cst {dimension_numbers = #tpu.dot_dimension_numbers<[1], [0], [0], [1], [0, 0, 1, 1], [], []>} : vector<128x128xbf16>, vector<128x128xbf16>, vector<128x128xf32> -> vector<128x128xf32>
    %7 = arith.addf %3, %6 : vector<128x128xf32>
    %c0_6 = arith.constant 0 : index
    %c0_7 = arith.constant 0 : index
    %8 = vector.load %arg8[%c0_6, %c0_7] : memref<128x128xf32, #tpu.memory_space<vmem>>, vector<128x128xf32>
    tpu.vector_store %arg8[%c0_6, %c0_7], %7 {strides = array<i32>} : memref<128x128xf32, #tpu.memory_space<vmem>>, vector<128x128xf32>,
    %c1_i32 = arith.constant 1 : i32
    %9 = arith.cmpi eq, %arg1, %c1_i32 : i32
    %10 = arith.extui %9 : i1 to i32
    %c0_i32_8 = arith.constant 0 : i32
    %11 = arith.cmpi ne, %10, %c0_i32_8 : i32
    scf.if %11 {
      %c0_9 = arith.constant 0 : index
      %c0_10 = arith.constant 0 : index
      %12 = vector.load %arg8[%c0_9, %c0_10] : memref<128x128xf32, #tpu.memory_space<vmem>>, vector<128x128xf32>
      %13 = arith.truncf %12 : vector<128x128xf32> to vector<128x128xbf16>
      %c0_11 = arith.constant 0 : index
      %c0_12 = arith.constant 0 : index
      %14 = vector.load %arg4[%c0_11, %c0_12] : memref<128x128xbf16, #tpu.memory_space<vmem>>, vector<128x128xbf16>
      %15 = tpu.concatenate %13, %14 in 1 : vector<128x128xbf16>, vector<128x128xbf16> -> vector<128x256xbf16>
      %c0_13 = arith.constant 0 : index
      %c0_14 = arith.constant 0 : index
      %16 = vector.load %arg5[%c0_13, %c0_14] : memref<256x128xbf16, #tpu.memory_space<vmem>>, vector<256x128xbf16>
      %cst_15 = arith.constant dense<0.000000e+00> : vector<128x128xf32>
      %17 = tpu.matmul %15, %16, %cst_15 {dimension_numbers = #tpu.dot_dimension_numbers<[1], [0], [0], [1], [0, 0, 1, 1], [], []>} : vector<128x256xbf16>, vector<256x128xbf16>, vector<128x128xf32> -> vector<128x128xf32>
      %c0_16 = arith.constant 0 : index
      %c0_17 = arith.constant 0 : index
      %18 = vector.load %arg6[%c0_16, %c0_17] : memref<1x128xf32, #tpu.memory_space<vmem>>, vector<1x128xf32>
      %19 = vector.broadcast %18 : vector<1x128xf32> to vector<128x128xf32>
      %20 = arith.addf %17, %19 : vector<128x128xf32>
      %c0_18 = arith.constant 0 : index
      %c0_19 = arith.constant 0 : index
      %21 = vector.load %arg7[%c0_18, %c0_19] : memref<128x128xf32, #tpu.memory_space<vmem>>, vector<128x128xf32>
      tpu.vector_store %arg7[%c0_18, %c0_19], %20 {strides = array<i32>} : memref<128x128xf32, #tpu.memory_space<vmem>>, vector<128x128xf32>,
    } else {
    }
    return
  }
  func.func @transform_0(%arg0: i32, %arg1: i32) -> (i32, i32) {
    %c0_i32 = arith.constant 0 : i32
    return %arg0, %arg1 : i32, i32
  }
  func.func @transform_1(%arg0: i32, %arg1: i32) -> (i32, i32) {
    %c0_i32 = arith.constant 0 : i32
    %c0_i32_0 = arith.constant 0 : i32
    return %arg1, %c0_i32 : i32, i32
  }
  func.func @transform_2(%arg0: i32, %arg1: i32) -> (i32, i32) {
    %c0_i32 = arith.constant 0 : i32
    %c0_i32_0 = arith.constant 0 : i32
    return %arg0, %c0_i32 : i32, i32
  }
  func.func @transform_3(%arg0: i32, %arg1: i32) -> (i32, i32) {
    %c0_i32 = arith.constant 0 : i32
    %c0_i32_0 = arith.constant 0 : i32
    %c0_i32_1 = arith.constant 0 : i32
    return %c0_i32, %c0_i32_0 : i32, i32
  }
  func.func @transform_4(%arg0: i32, %arg1: i32) -> (i32, i32) {
    %c0_i32 = arith.constant 0 : i32
    %c0_i32_0 = arith.constant 0 : i32
    %c0_i32_1 = arith.constant 0 : i32
    return %c0_i32, %c0_i32_0 : i32, i32
  }
  func.func @transform_5(%arg0: i32, %arg1: i32) -> (i32, i32) {
    %c0_i32 = arith.constant 0 : i32
    %c0_i32_0 = arith.constant 0 : i32
    return %arg0, %c0_i32 : i32, i32
  }
}

</mosaic_0001>

<llo_original>
// kernel: gnn_forward.3
$region0: #{gnn_forward.3}
  #allocation0 [shape = 'u32[]', space=smem, size = 0x4, offset = 0x4, fixed_abs, tag = 'smem constant byte address 0x4 - core index']
  #allocation1 [shape = 'u32[72,128]{1,0:T(1,128)}', space=vmem, size = 0x9000, scoped, tag = 'internal scratch']
  #allocation2 [shape = 'f32[128,128]{1,0:T(8,128)}', space=vmem, size = 0x10000, scoped, tag = 'scratch operand']
  %s0 = inlined_call_operand.vmem [shape: bf16[256,256], index: 0, kind: input, shape index: {}]
  %s1 = inlined_call_operand.vmem [shape: bf16[256,128], index: 1, kind: input, shape index: {}, may-alias: {1,2}]
  %s2 = inlined_call_operand.vmem [shape: bf16[256,128], index: 2, kind: input, shape index: {}, may-alias: {1,2}]
  %s3 = inlined_call_operand.vmem [shape: bf16[256,128], index: 3, kind: input, shape index: {}]
  %s4 = inlined_call_operand.vmem [shape: f32[1,128], index: 4, kind: input, shape index: {}]
  %s5 = inlined_call_operand.vmem [shape: bf16[256,128], index: 5, kind: output, shape index: {}]
  %s6 = sld [smem:[#allocation0]]
  $region102: #{gnn_forward.3} parent=0
    _
  %s8 = ssub.s32 1, %s6
  %s9 = scalar_select 0, %s8, %s6
  $region1: #{gnn_forward.3} parent=0
    #allocation3 [shape = 'u8[65536]{0}', space=vmem, size = 0x10000, scoped, tag = 'input window, operand 0']
    loop: start=0, step=1, limit=6
    $region2: #{gnn_forward.3} parent=1 // loop_pre_header
      _
    $region3: #{gnn_forward.3} parent=1 // loop_header
      %s11 = sphi 0, %s15
      %p12 = scmp.ge.s32.totalorder %s11, 6
      %s18 = sphi 0, %s30
      %s19 = sphi 0, %s26
      %s20 = sphi 0, %s18
      %s21 = sphi 0, %s19
      %s22 = sphi 0, %s20
      %s23 = sphi 0, %s21
      %s35 = sphi 0, %s37
      %s38 = sphi 0, %s35
      %s39 = sphi 0, %s38
      %s55 = sphi 0, %s39
      %s61 = sphi 0, %s63
      %s64 = sphi 0, %s61
      %s65 = sphi 0, %s64
      %s81 = sphi 0, %s65
      %s87 = sphi 0, %s89
      %s90 = sphi 0, %s87
      %s91 = sphi 0, %s90
      %s107 = sphi 0, %s91
      %s111 = sphi 0, %s111
      %s113 = sphi 0, %s111
      %s114 = sphi 0, %s113
      %s128 = sphi 0, %s114
      %s132 = sphi 0, %s132
      %s134 = sphi 0, %s132
      %s135 = sphi 0, %s134
      %s149 = sphi 0, %s135
      %s155 = sphi 0, %s157
      %s158 = sphi 0, %s155
      %s159 = sphi 0, %s158
      %s175 = sphi 0, %s159
    $region4: #{gnn_forward.3} parent=1 // loop_header_branch
      %14 = sbr.rel (%p12) target = $region8
    $region5: #{gnn_forward.3} parent=1 // loop_body
      %s16 = ssub.s32 %s11, 1
      %s17 = ssub.s32 %s11, 2
      %s24 = sadd.s32 1, %s19
      %p25 = scmp.ge.s32.totalorder %s24, 2
      %s26 = scalar_select %p25, 0, %s24
      %s27 = sadd.s32 1, %s18
      %s28 = scalar_select %p25, %s27, %s18
      %p29 = scmp.ge.s32.totalorder %s28, 2
      %s30 = scalar_select %p29, 0, %s28
      %s31 = ssub.s32 %s18, %s30
      %s32 = ssub.s32 %s19, %s26
      %s33 = sor.u32 %s31, %s32
      %p34 = scmp.eq.s32.totalorder %s33, 0
      %s36 = sadd.s32 %s35, 1
      %s37 = scalar_select %p34, %s35, %s36
      %p40 = pneg %p34
      %p41 = scmp.eq.s32.totalorder %s11, 3
      %p42 = por %p40, %p41
      %p43 = scmp.ne.s32.totalorder %s35, %s38
      %p44 = scmp.eq.s32.totalorder %s11, 0
      %p45 = por %p43, %p44
      %p46 = scmp.ne.s32.totalorder %s35, %s38
      %p47 = scmp.eq.s32.totalorder %s16, 3
      %p48 = por %p46, %p47
      %p49 = scmp.ne.s32.totalorder %s38, %s39
      %p50 = scmp.eq.s32.totalorder %s16, 0
      %p51 = por %p49, %p50
      %p52 = scmp.ne.s32.totalorder %s38, %s39
      %p53 = scmp.eq.s32.totalorder %s17, 3
      %p54 = por %p52, %p53
      %p56 = scmp.ne.s32.totalorder %s39, %s55
      %p57 = scmp.eq.s32.totalorder %s17, 0
      %p58 = por %p56, %p57
      %s59 = ssub.s32 %s19, %s26
      %p60 = scmp.eq.s32.totalorder %s59, 0
      %s62 = sadd.s32 %s61, 1
      %s63 = scalar_select %p60, %s61, %s62
      %p66 = pneg %p60
      %p67 = scmp.eq.s32.totalorder %s11, 3
      %p68 = por %p66, %p67
      %p69 = scmp.ne.s32.totalorder %s61, %s64
      %p70 = scmp.eq.s32.totalorder %s11, 0
      %p71 = por %p69, %p70
      %p72 = scmp.ne.s32.totalorder %s61, %s64
      %p73 = scmp.eq.s32.totalorder %s16, 3
      %p74 = por %p72, %p73
      %p75 = scmp.ne.s32.totalorder %s64, %s65
      %p76 = scmp.eq.s32.totalorder %s16, 0
      %p77 = por %p75, %p76
      %p78 = scmp.ne.s32.totalorder %s64, %s65
      %p79 = scmp.eq.s32.totalorder %s17, 3
      %p80 = por %p78, %p79
      %p82 = scmp.ne.s32.totalorder %s65, %s81
      %p83 = scmp.eq.s32.totalorder %s17, 0
      %p84 = por %p82, %p83
      %s85 = ssub.s32 %s18, %s30
      %p86 = scmp.eq.s32.totalorder %s85, 0
      %s88 = sadd.s32 %s87, 1
      %s89 = scalar_select %p86, %s87, %s88
      %p92 = pneg %p86
      %p93 = scmp.eq.s32.totalorder %s11, 3
      %p94 = por %p92, %p93
      %p95 = scmp.ne.s32.totalorder %s87, %s90
      %p96 = scmp.eq.s32.totalorder %s11, 0
      %p97 = por %p95, %p96
      %p98 = scmp.ne.s32.totalorder %s87, %s90
      %p99 = scmp.eq.s32.totalorder %s16, 3
      %p100 = por %p98, %p99
      %p101 = scmp.ne.s32.totalorder %s90, %s91
      %p102 = scmp.eq.s32.totalorder %s16, 0
      %p103 = por %p101, %p102
      %p104 = scmp.ne.s32.totalorder %s90, %s91
      %p105 = scmp.eq.s32.totalorder %s17, 3
      %p106 = por %p104, %p105
      %p108 = scmp.ne.s32.totalorder %s91, %s107
      %p109 = scmp.eq.s32.totalorder %s17, 0
      %p110 = por %p108, %p109
      %s112 = sadd.s32 %s111, 1
      %p115 = scmp.eq.s32.totalorder %s11, 3
      %p116 = scmp.ne.s32.totalorder %s111, %s113
      %p117 = scmp.eq.s32.totalorder %s11, 0
      %p118 = por %p116, %p117
      %p119 = scmp.ne.s32.totalorder %s111, %s113
      %p120 = scmp.eq.s32.totalorder %s16, 3
      %p121 = por %p119, %p120
      %p122 = scmp.ne.s32.totalorder %s113, %s114
      %p123 = scmp.eq.s32.totalorder %s16, 0
      %p124 = por %p122, %p123
      %p125 = scmp.ne.s32.totalorder %s113, %s114
      %p126 = scmp.eq.s32.totalorder %s17, 3
      %p127 = por %p125, %p126
      %p129 = scmp.ne.s32.totalorder %s114, %s128
      %p130 = scmp.eq.s32.totalorder %s17, 0
      %p131 = por %p129, %p130
      %s133 = sadd.s32 %s132, 1
      %p136 = scmp.eq.s32.totalorder %s11, 3
      %p137 = scmp.ne.s32.totalorder %s132, %s134
      %p138 = scmp.eq.s32.totalorder %s11, 0
      %p139 = por %p137, %p138
      %p140 = scmp.ne.s32.totalorder %s132, %s134
      %p141 = scmp.eq.s32.totalorder %s16, 3
      %p142 = por %p140, %p141
      %p143 = scmp.ne.s32.totalorder %s134, %s135
      %p144 = scmp.eq.s32.totalorder %s16, 0
      %p145 = por %p143, %p144
      %p146 = scmp.ne.s32.totalorder %s134, %s135
      %p147 = scmp.eq.s32.totalorder %s17, 3
      %p148 = por %p146, %p147
      %p150 = scmp.ne.s32.totalorder %s135, %s149
      %p151 = scmp.eq.s32.totalorder %s17, 0
      %p152 = por %p150, %p151
      %s153 = ssub.s32 %s18, %s30
      %p154 = scmp.eq.s32.totalorder %s153, 0
      %s156 = sadd.s32 %s155, 1
      %s157 = scalar_select %p154, %s155, %s156
      %p160 = pneg %p154
      %p161 = scmp.eq.s32.totalorder %s11, 3
      %p162 = por %p160, %p161
      %p163 = scmp.ne.s32.totalorder %s155, %s158
      %p164 = scmp.eq.s32.totalorder %s11, 0
      %p165 = por %p163, %p164
      %p166 = scmp.ne.s32.totalorder %s155, %s158
      %p167 = scmp.eq.s32.totalorder %s16, 3
      %p168 = por %p166, %p167
      %p169 = scmp.ne.s32.totalorder %s158, %s159
      %p170 = scmp.eq.s32.totalorder %s16, 0
      %p171 = por %p169, %p170
      %p172 = scmp.ne.s32.totalorder %s158, %s159
      %p173 = scmp.eq.s32.totalorder %s17, 3
      %p174 = por %p172, %p173
      %p176 = scmp.ne.s32.totalorder %s159, %s175
      %p177 = scmp.eq.s32.totalorder %s17, 0
      %p178 = por %p176, %p177
      %p179 = scmp.le.s32.totalorder 1, %s11
      %p180 = scmp.lt.s32.totalorder %s11, 5
      %p181 = pnand %p179, %p180
      %p182 = pneg %p181
      // Predicated region
      $region9: #{gnn_forward.3} parent=5 // pred_check
        _
      $region10: #{gnn_forward.3} parent=5 // pred_check_branch
        %184 = sbr.rel (%p181) target = $region12
      $region11: #{gnn_forward.3} parent=5 // pred_region
        %s185 = ssub.s32 %s11, 1
        // Predicated region
        $region13: #{gnn_forward.3} parent=11 // pred_check
          %p186 = pneg %p124
        $region14: #{gnn_forward.3} parent=11 // pred_check_branch
          %188 = sbr.rel (%p186) target = $region16
        $region15: #{gnn_forward.3} parent=11 // pred_region
          _
        $region16: #{gnn_forward.3} parent=11 // pred_fallthru
          _
        // Predicated region
        $region17: #{gnn_forward.3} parent=11 // pred_check
          %p189 = pneg %p145
        $region18: #{gnn_forward.3} parent=11 // pred_check_branch
          %191 = sbr.rel (%p189) target = $region20
        $region19: #{gnn_forward.3} parent=11 // pred_region
          _
        $region20: #{gnn_forward.3} parent=11 // pred_fallthru
          _
      $region12: #{gnn_forward.3} parent=5 // pred_fallthru
        _
      %p192 = scmp.lt.s32.totalorder %s11, 4
      // Predicated region
      $region21: #{gnn_forward.3} parent=5 // pred_check
        %p193 = pneg %p192
      $region22: #{gnn_forward.3} parent=5 // pred_check_branch
        %195 = sbr.rel (%p193) target = $region24
      $region23: #{gnn_forward.3} parent=5 // pred_region
        // Predicated region
        $region25: #{gnn_forward.3} parent=23 // pred_check
          %p196 = pneg %p45
        $region26: #{gnn_forward.3} parent=23 // pred_check_branch
          %198 = sbr.rel (%p196) target = $region28
        $region27: #{gnn_forward.3} parent=23 // pred_region
          %s199 = sand.u32 %s35, 1
          %s200 = sand.u32 %s35, 1
          %s201 = smul.addr %s200, 64
          %s202 = scalar_lea.vmem [#allocation3], %s201
          %s203 = smul.u32 16, %s18
          %s204 = smul.addr %s203, 2
          %s205 = sadd.s32 %s19, %s204
          %s206 = smul.addr %s205, 4
          %s207 = scalar_lea.vmem %s0, %s206
          // Predicated region
          $region29: #{gnn_forward.3} parent=27 // pred_check
            _
          $region30: #{gnn_forward.3} parent=27 // pred_check_branch
            %209 = sbr.rel (0) target = $region32
          $region31: #{gnn_forward.3} parent=27 // pred_region
            // Predicated region
            $region33: #{gnn_forward.3} parent=31 // pred_check
              _
            $region34: #{gnn_forward.3} parent=31 // pred_check_branch
              %211 = sbr.rel target = $region36
            $region35: #{gnn_forward.3} parent=31 // pred_region
              // Predicated region
              $region48: #{gnn_forward.3} parent=35 // pred_check
                _
              $region49: #{gnn_forward.3} parent=35 // pred_check_branch
                %257 = sbr.rel (0) target = $region51
              $region50: #{gnn_forward.3} parent=35 // pred_region
                loop: start=0, step=1, limit=1
                $region52: #{gnn_forward.3} parent=50 // loop_pre_header
                  _
                $region53: #{gnn_forward.3} parent=50 // loop_header
                  %s259 = sphi 0, %s263
                  %p260 = scmp.ge.s32.totalorder %s259, 1
                  %s264 = sphi %s207, %s207
                  %s265 = sphi %s202, %s202
                $region54: #{gnn_forward.3} parent=50 // loop_header_branch
                  %262 = sbr.rel (%p260) target = $region58
                $region55: #{gnn_forward.3} parent=50 // loop_body
                  _
                $region56: #{gnn_forward.3} parent=50 // loop_footer
                  %s263 = sadd.s32 1, %s259
                $region57: #{gnn_forward.3} parent=50 // loop_footer_branch
                  %258 = sbr.rel target = $region53
                $region58: #{gnn_forward.3} parent=50 // loop_exit
                  _
                %s267 = ssub.s32 16, 1
                loop: start=0, step=1, limit=1
                $region59: #{gnn_forward.3} parent=50 // loop_pre_header
                  _
                $region60: #{gnn_forward.3} parent=50 // loop_header
                  %s269 = sphi 0, %s273
                  %p270 = scmp.ge.s32.totalorder %s269, 1
                  %s274 = sphi %s207, %s207
                  %s275 = sphi %s202, %s202
                $region61: #{gnn_forward.3} parent=50 // loop_header_branch
                  %272 = sbr.rel (%p270) target = $region65
                $region62: #{gnn_forward.3} parent=50 // loop_body
                  %v276 = vld [vmem:[%s274] sm:%s267]
                  %277 = vst [vmem:[%s275] sm:%s267] %v276
                  %v278 = vld [vmem:[%s274 + $0x8] sm:%s267]
                  %279 = vst [vmem:[%s275 + $0x4] sm:%s267] %v278
                  %v280 = vld [vmem:[%s274 + $0x10] sm:%s267]
                  %281 = vst [vmem:[%s275 + $0x8] sm:%s267] %v280
                  %v282 = vld [vmem:[%s274 + $0x18] sm:%s267]
                  %283 = vst [vmem:[%s275 + $0xc] sm:%s267] %v282
                  %v284 = vld [vmem:[%s274 + $0x20] sm:%s267]
                  %285 = vst [vmem:[%s275 + $0x10] sm:%s267] %v284
                  %v286 = vld [vmem:[%s274 + $0x28] sm:%s267]
                  %287 = vst [vmem:[%s275 + $0x14] sm:%s267] %v286
                  %v288 = vld [vmem:[%s274 + $0x30] sm:%s267]
                  %289 = vst [vmem:[%s275 + $0x18] sm:%s267] %v288
                  %v290 = vld [vmem:[%s274 + $0x38] sm:%s267]
                  %291 = vst [vmem:[%s275 + $0x1c] sm:%s267] %v290
                  %v292 = vld [vmem:[%s274 + $0x40] sm:%s267]
                  %293 = vst [vmem:[%s275 + $0x20] sm:%s267] %v292
                  %v294 = vld [vmem:[%s274 + $0x48] sm:%s267]
                  %295 = vst [vmem:[%s275 + $0x24] sm:%s267] %v294
                  %v296 = vld [vmem:[%s274 + $0x50] sm:%s267]
                  %297 = vst [vmem:[%s275 + $0x28] sm:%s267] %v296
                  %v298 = vld [vmem:[%s274 + $0x58] sm:%s267]
                  %299 = vst [vmem:[%s275 + $0x2c] sm:%s267] %v298
                  %v300 = vld [vmem:[%s274 + $0x60] sm:%s267]
                  %301 = vst [vmem:[%s275 + $0x30] sm:%s267] %v300
                  %v302 = vld [vmem:[%s274 + $0x68] sm:%s267]
                  %303 = vst [vmem:[%s275 + $0x34] sm:%s267] %v302
                  %v304 = vld [vmem:[%s274 + $0x70] sm:%s267]
                  %305 = vst [vmem:[%s275 + $0x38] sm:%s267] %v304
                  %v306 = vld [vmem:[%s274 + $0x78] sm:%s267]
                  %307 = vst [vmem:[%s275 + $0x3c] sm:%s267] %v306
                $region63: #{gnn_forward.3} parent=50 // loop_footer
                  %s273 = sadd.s32 1, %s269
                $region64: #{gnn_forward.3} parent=50 // loop_footer_branch
                  %268 = sbr.rel target = $region60
                $region65: #{gnn_forward.3} parent=50 // loop_exit
                  _
              $region51: #{gnn_forward.3} parent=35 // pred_fallthru
                _
            $region36: #{gnn_forward.3} parent=31 // pred_fallthru
              _
            // Predicated region
            $region37: #{gnn_forward.3} parent=31 // pred_check
              _
            $region38: #{gnn_forward.3} parent=31 // pred_check_branch
              %213 = sbr.rel (0) target = $region40
            $region39: #{gnn_forward.3} parent=31 // pred_region
              %s215 = ssub.s32 16, 1
              loop: start=0, step=1, limit=1
              $region41: #{gnn_forward.3} parent=39 // loop_pre_header
                _
              $region42: #{gnn_forward.3} parent=39 // loop_header
                %s217 = sphi 0, %s221
                %p218 = scmp.ge.s32.totalorder %s217, 1
                %s222 = sphi %s207, %s207
                %s223 = sphi %s202, %s202
              $region43: #{gnn_forward.3} parent=39 // loop_header_branch
                %220 = sbr.rel (%p218) target = $region47
              $region44: #{gnn_forward.3} parent=39 // loop_body
                %v224 = vld [vmem:[%s222] sm:%s215]
                %225 = vst [vmem:[%s223] sm:%s215] %v224
                %v226 = vld [vmem:[%s222 + $0x8] sm:%s215]
                %227 = vst [vmem:[%s223 + $0x4] sm:%s215] %v226
                %v228 = vld [vmem:[%s222 + $0x10] sm:%s215]
                %229 = vst [vmem:[%s223 + $0x8] sm:%s215] %v228
                %v230 = vld [vmem:[%s222 + $0x18] sm:%s215]
                %231 = vst [vmem:[%s223 + $0xc] sm:%s215] %v230
                %v232 = vld [vmem:[%s222 + $0x20] sm:%s215]
                %233 = vst [vmem:[%s223 + $0x10] sm:%s215] %v232
                %v234 = vld [vmem:[%s222 + $0x28] sm:%s215]
                %235 = vst [vmem:[%s223 + $0x14] sm:%s215] %v234
                %v236 = vld [vmem:[%s222 + $0x30] sm:%s215]
                %237 = vst [vmem:[%s223 + $0x18] sm:%s215] %v236
                %v238 = vld [vmem:[%s222 + $0x38] sm:%s215]
                %239 = vst [vmem:[%s223 + $0x1c] sm:%s215] %v238
                %v240 = vld [vmem:[%s222 + $0x40] sm:%s215]
                %241 = vst [vmem:[%s223 + $0x20] sm:%s215] %v240
                %v242 = vld [vmem:[%s222 + $0x48] sm:%s215]
                %243 = vst [vmem:[%s223 + $0x24] sm:%s215] %v242
                %v244 = vld [vmem:[%s222 + $0x50] sm:%s215]
                %245 = vst [vmem:[%s223 + $0x28] sm:%s215] %v244
                %v246 = vld [vmem:[%s222 + $0x58] sm:%s215]
                %247 = vst [vmem:[%s223 + $0x2c] sm:%s215] %v246
                %v248 = vld [vmem:[%s222 + $0x60] sm:%s215]
                %249 = vst [vmem:[%s223 + $0x30] sm:%s215] %v248
                %v250 = vld [vmem:[%s222 + $0x68] sm:%s215]
                %251 = vst [vmem:[%s223 + $0x34] sm:%s215] %v250
                %v252 = vld [vmem:[%s222 + $0x70] sm:%s215]
                %253 = vst [vmem:[%s223 + $0x38] sm:%s215] %v252
                %v254 = vld [vmem:[%s222 + $0x78] sm:%s215]
                %255 = vst [vmem:[%s223 + $0x3c] sm:%s215] %v254
              $region45: #{gnn_forward.3} parent=39 // loop_footer
                %s221 = sadd.s32 1, %s217
              $region46: #{gnn_forward.3} parent=39 // loop_footer_branch
                %216 = sbr.rel target = $region42
              $region47: #{gnn_forward.3} parent=39 // loop_exit
                _
            $region40: #{gnn_forward.3} parent=31 // pred_fallthru
              _
          $region32: #{gnn_forward.3} parent=27 // pred_fallthru
            _
          %308 = vnop
        $region28: #{gnn_forward.3} parent=23 // pred_fallthru
          _
        // Predicated region
        $region66: #{gnn_forward.3} parent=23 // pred_check
          %p309 = pneg %p71
        $region67: #{gnn_forward.3} parent=23 // pred_check_branch
          %311 = sbr.rel (%p309) target = $region69
        $region68: #{gnn_forward.3} parent=23 // pred_region
          %s312 = smul.u32 16, %s19
          %p313 = scmp.lt.s32.totalorder %s312, 31
          %s314 = scalar_select %p313, %s312, 31
          %s315 = smul.addr %s314, 4
          %s316 = scalar_lea.vmem %s1, %s315
          %s317 = smul.u32 16, %s19
        $region69: #{gnn_forward.3} parent=23 // pred_fallthru
          _
        // Predicated region
        $region70: #{gnn_forward.3} parent=23 // pred_check
          %p318 = pneg %p97
        $region71: #{gnn_forward.3} parent=23 // pred_check_branch
          %320 = sbr.rel (%p318) target = $region73
        $region72: #{gnn_forward.3} parent=23 // pred_region
          %s321 = smul.u32 16, %s18
          %p322 = scmp.lt.s32.totalorder %s321, 31
          %s323 = scalar_select %p322, %s321, 31
          %s324 = smul.addr %s323, 4
          %s325 = scalar_lea.vmem %s2, %s324
          %s326 = smul.u32 16, %s18
        $region73: #{gnn_forward.3} parent=23 // pred_fallthru
          _
      $region24: #{gnn_forward.3} parent=5 // pred_fallthru
        _
      %p327 = scmp.le.s32.totalorder 1, %s11
      %p328 = scmp.lt.s32.totalorder %s11, 5
      %p329 = pnand %p327, %p328
      %p330 = pneg %p329
      // Predicated region
      $region74: #{gnn_forward.3} parent=5 // pred_check
        _
      $region75: #{gnn_forward.3} parent=5 // pred_check_branch
        %332 = sbr.rel (%p329) target = $region77
      $region76: #{gnn_forward.3} parent=5 // pred_region
        %s333 = ssub.s32 %s11, 1
        %s334 = sand.u32 %s38, 1
        %s335 = sand.u32 %s38, 1
        %s336 = smul.addr %s335, 64
        %s337 = scalar_lea.vmem [#allocation3], %s336
        // Predicated region
        $region78: #{gnn_forward.3} parent=76 // pred_check
          %p338 = pneg %p51
        $region79: #{gnn_forward.3} parent=76 // pred_check_branch
          %340 = sbr.rel (%p338) target = $region81
        $region80: #{gnn_forward.3} parent=76 // pred_region
          _
        $region81: #{gnn_forward.3} parent=76 // pred_fallthru
          _
        %s341 = sand.u32 %s38, 1
        %s342 = sand.u32 %s38, 1
        %s343 = smul.addr %s342, 64
        %s344 = scalar_lea.vmem [#allocation3], %s343
        %p345 = pneg %p51
        %p346 = pneg %p48
        %s347 = smul.u32 16, %s21
        %p348 = scmp.lt.s32.totalorder %s347, 31
        %s349 = scalar_select %p348, %s347, 31
        %s350 = smul.addr %s349, 4
        %s351 = scalar_lea.vmem %s1, %s350
        %p352 = pneg %p77
        %p353 = pneg %p74
        %s354 = smul.u32 16, %s20
        %p355 = scmp.lt.s32.totalorder %s354, 31
        %s356 = scalar_select %p355, %s354, 31
        %s357 = smul.addr %s356, 4
        %s358 = scalar_lea.vmem %s2, %s357
        %p359 = pneg %p103
        %p360 = pneg %p100
        %p361 = pneg %p124
        %p362 = pneg %p121
        %p363 = pneg %p145
        %p364 = pneg %p142
        %p365 = pneg %p171
        %p366 = pneg %p168
        %s367 = smul.u32 16, %s20
        %p368 = scmp.lt.s32.totalorder %s367, 31
        %s369 = scalar_select %p368, %s367, 31
        %s370 = smul.addr %s369, 4
        %s371 = scalar_lea.vmem %s5, %s370
        %s372 = smul.u32 16, %s20
        %s373 = smul.u32 16, %s21
        %p374 = scmp.lt.s32.totalorder %s373, 31
        %s375 = scalar_select %p374, %s373, 31
        %s376 = smul.addr %s375, 4
        %s377 = scalar_lea.vmem %s1, %s376
        %s378 = smul.u32 16, %s21
        %s379 = smul.u32 16, %s20
        %p380 = scmp.lt.s32.totalorder %s379, 31
        %s381 = scalar_select %p380, %s379, 31
        %s382 = smul.addr %s381, 4
        %s383 = scalar_lea.vmem %s2, %s382
        %s384 = smul.u32 16, %s20
        %s385 = smul.u32 16, %s20
        %p386 = scmp.lt.s32.totalorder %s385, 31
        %s387 = scalar_select %p386, %s385, 31
        %s388 = smul.addr %s387, 4
        %s389 = scalar_lea.vmem %s5, %s388
        %s390 = smul.u32 16, %s20
        %p391 = scmp.eq.s32.totalorder %s21, 0
        // Predicated region
        $region82: #{gnn_forward.3} parent=76 // pred_check
          %p392 = pneg %p391
        $region83: #{gnn_forward.3} parent=76 // pred_check_branch
          %394 = sbr.rel (%p392) target = $region85
        $region84: #{gnn_forward.3} parent=76 // pred_region
          %395 = vst [vmem:[#allocation2] sm:$0xff] 0.0
          %396 = vst [vmem:[#allocation2 + $0x8] sm:$0xff] 0.0
          %397 = vst [vmem:[#allocation2 + $0x10] sm:$0xff] 0.0
          %398 = vst [vmem:[#allocation2 + $0x18] sm:$0xff] 0.0
          %399 = vst [vmem:[#allocation2 + $0x20] sm:$0xff] 0.0
          %400 = vst [vmem:[#allocation2 + $0x28] sm:$0xff] 0.0
          %401 = vst [vmem:[#allocation2 + $0x30] sm:$0xff] 0.0
          %402 = vst [vmem:[#allocation2 + $0x38] sm:$0xff] 0.0
          %403 = vst [vmem:[#allocation2 + $0x40] sm:$0xff] 0.0
          %404 = vst [vmem:[#allocation2 + $0x48] sm:$0xff] 0.0
          %405 = vst [vmem:[#allocation2 + $0x50] sm:$0xff] 0.0
          %406 = vst [vmem:[#allocation2 + $0x58] sm:$0xff] 0.0
          %407 = vst [vmem:[#allocation2 + $0x60] sm:$0xff] 0.0
          %408 = vst [vmem:[#allocation2 + $0x68] sm:$0xff] 0.0
          %409 = vst [vmem:[#allocation2 + $0x70] sm:$0xff] 0.0
          %410 = vst [vmem:[#allocation2 + $0x78] sm:$0xff] 0.0
        $region85: #{gnn_forward.3} parent=76 // pred_fallthru
          _
        %v411 = vld [vmem:[#allocation2] sm:$0xff]
        %v412 = vld [vmem:[#allocation2 + $0x8] sm:$0xff]
        %v413 = vld [vmem:[#allocation2 + $0x10] sm:$0xff]
        %v414 = vld [vmem:[#allocation2 + $0x18] sm:$0xff]
        %v415 = vld [vmem:[#allocation2 + $0x20] sm:$0xff]
        %v416 = vld [vmem:[#allocation2 + $0x28] sm:$0xff]
        %v417 = vld [vmem:[#allocation2 + $0x30] sm:$0xff]
        %v418 = vld [vmem:[#allocation2 + $0x38] sm:$0xff]
        %v419 = vld [vmem:[#allocation2 + $0x40] sm:$0xff]
        %v420 = vld [vmem:[#allocation2 + $0x48] sm:$0xff]
        %v421 = vld [vmem:[#allocation2 + $0x50] sm:$0xff]
        %v422 = vld [vmem:[#allocation2 + $0x58] sm:$0xff]
        %v423 = vld [vmem:[#allocation2 + $0x60] sm:$0xff]
        %v424 = vld [vmem:[#allocation2 + $0x68] sm:$0xff]
        %v425 = vld [vmem:[#allocation2 + $0x70] sm:$0xff]
        %v426 = vld [vmem:[#allocation2 + $0x78] sm:$0xff]
        %v427 = vld [vmem:[%s337] sm:$0xf]
        %v428 = vld [vmem:[%s337 + $0x4] sm:$0xf]
        %v429 = vld [vmem:[%s337 + $0x8] sm:$0xf]
        %v430 = vld [vmem:[%s337 + $0xc] sm:$0xf]
        %v431 = vld [vmem:[%s337 + $0x10] sm:$0xf]
        %v432 = vld [vmem:[%s337 + $0x14] sm:$0xf]
        %v433 = vld [vmem:[%s337 + $0x18] sm:$0xf]
        %v434 = vld [vmem:[%s337 + $0x1c] sm:$0xf]
        %v435 = vld [vmem:[%s337 + $0x20] sm:$0xf]
        %v436 = vld [vmem:[%s337 + $0x24] sm:$0xf]
        %v437 = vld [vmem:[%s337 + $0x28] sm:$0xf]
        %v438 = vld [vmem:[%s337 + $0x2c] sm:$0xf]
        %v439 = vld [vmem:[%s337 + $0x30] sm:$0xf]
        %v440 = vld [vmem:[%s337 + $0x34] sm:$0xf]
        %v441 = vld [vmem:[%s337 + $0x38] sm:$0xf]
        %v442 = vld [vmem:[%s337 + $0x3c] sm:$0xf]
        %v443 = vld [vmem:[%s377] sm:$0xf]
        %v444 = vld [vmem:[%s377 + $0x4] sm:$0xf]
        %v445 = vld [vmem:[%s377 + $0x8] sm:$0xf]
        %v446 = vld [vmem:[%s377 + $0xc] sm:$0xf]
        %v447 = vld [vmem:[%s377 + $0x10] sm:$0xf]
        %v448 = vld [vmem:[%s377 + $0x14] sm:$0xf]
        %v449 = vld [vmem:[%s377 + $0x18] sm:$0xf]
        %v450 = vld [vmem:[%s377 + $0x1c] sm:$0xf]
        %v451 = vld [vmem:[%s377 + $0x20] sm:$0xf]
        %v452 = vld [vmem:[%s377 + $0x24] sm:$0xf]
        %v453 = vld [vmem:[%s377 + $0x28] sm:$0xf]
        %v454 = vld [vmem:[%s377 + $0x2c] sm:$0xf]
        %v455 = vld [vmem:[%s377 + $0x30] sm:$0xf]
        %v456 = vld [vmem:[%s377 + $0x34] sm:$0xf]
        %v457 = vld [vmem:[%s377 + $0x38] sm:$0xf]
        %v458 = vld [vmem:[%s377 + $0x3c] sm:$0xf]
        %v475 = vunpack.c.l.b16 %v427
        %v476 = vunpack.c.l.b16 %v428
        %v477 = vunpack.c.l.b16 %v429
        %v478 = vunpack.c.l.b16 %v430
        %v479 = vunpack.c.l.b16 %v431
        %v480 = vunpack.c.l.b16 %v432
        %v481 = vunpack.c.l.b16 %v433
        %v482 = vunpack.c.l.b16 %v434
        %v483 = vunpack.c.l.b16 %v435
        %v484 = vunpack.c.l.b16 %v436
        %v485 = vunpack.c.l.b16 %v437
        %v486 = vunpack.c.l.b16 %v438
        %v487 = vunpack.c.l.b16 %v439
        %v488 = vunpack.c.l.b16 %v440
        %v489 = vunpack.c.l.b16 %v441
        %v490 = vunpack.c.l.b16 %v442
        %v491 = vpack.c.b16 %v476, %v475
        %v492 = vpack.c.b16 %v478, %v477
        %v493 = vpack.c.b16 %v480, %v479
        %v494 = vpack.c.b16 %v482, %v481
        %v495 = vpack.c.b16 %v484, %v483
        %v496 = vpack.c.b16 %v486, %v485
        %v497 = vpack.c.b16 %v488, %v487
        %v498 = vpack.c.b16 %v490, %v489
        %v523 = vunpack.c.l.b16 %v443
        %v524 = vunpack.c.l.b16 %v444
        %v525 = vunpack.c.l.b16 %v445
        %v526 = vunpack.c.l.b16 %v446
        %v527 = vunpack.c.l.b16 %v447
        %v528 = vunpack.c.l.b16 %v448
        %v529 = vunpack.c.l.b16 %v449
        %v530 = vunpack.c.l.b16 %v450
        %v531 = vunpack.c.l.b16 %v451
        %v532 = vunpack.c.l.b16 %v452
        %v533 = vunpack.c.l.b16 %v453
        %v534 = vunpack.c.l.b16 %v454
        %v535 = vunpack.c.l.b16 %v455
        %v536 = vunpack.c.l.b16 %v456
        %v537 = vunpack.c.l.b16 %v457
        %v538 = vunpack.c.l.b16 %v458
        %v539 = vpack.c.b16 %v524, %v523
        %v540 = vpack.c.b16 %v526, %v525
        %v541 = vpack.c.b16 %v528, %v527
        %v542 = vpack.c.b16 %v530, %v529
        %v543 = vpack.c.b16 %v532, %v531
        %v544 = vpack.c.b16 %v534, %v533
        %v545 = vpack.c.b16 %v536, %v535
        %v546 = vpack.c.b16 %v538, %v537
        %555 = vmatpush.bf16.msra.mxu0 %v546
        %556 = vmatpush.bf16.msra.mxu0 %v545
        %557 = vmatpush.bf16.msra.mxu0 %v544
        %558 = vmatpush.bf16.msra.mxu0 %v543
        %559 = vmatpush.bf16.msra.mxu0 %v542
        %560 = vmatpush.bf16.msra.mxu0 %v541
        %561 = vmatpush.bf16.msra.mxu0 %v540
        %562 = vmatpush.bf16.msra.mxu0 %v539
        %563 = vmatmul.bf16.gmra.mxu0 %v491
        %v564 = vpop.f32.mrf.mxu0
        %v565 = vadd.f32 0.0, %v564
        %v566 = vpop.f32.mrf.mxu0
        %v567 = vadd.f32 0.0, %v566
        %568 = vmatmul.bf16.gmra.mxu0 %v492
        %v569 = vpop.f32.mrf.mxu0
        %v570 = vadd.f32 0.0, %v569
        %v571 = vpop.f32.mrf.mxu0
        %v572 = vadd.f32 0.0, %v571
        %573 = vmatmul.bf16.gmra.mxu0 %v493
        %v574 = vpop.f32.mrf.mxu0
        %v575 = vadd.f32 0.0, %v574
        %v576 = vpop.f32.mrf.mxu0
        %v577 = vadd.f32 0.0, %v576
        %578 = vmatmul.bf16.gmra.mxu0 %v494
        %v579 = vpop.f32.mrf.mxu0
        %v580 = vadd.f32 0.0, %v579
        %v581 = vpop.f32.mrf.mxu0
        %v582 = vadd.f32 0.0, %v581
        %583 = vmatmul.bf16.gmra.mxu0 %v495
        %v584 = vpop.f32.mrf.mxu0
        %v585 = vadd.f32 0.0, %v584
        %v586 = vpop.f32.mrf.mxu0
        %v587 = vadd.f32 0.0, %v586
        %588 = vmatmul.bf16.gmra.mxu0 %v496
        %v589 = vpop.f32.mrf.mxu0
        %v590 = vadd.f32 0.0, %v589
        %v591 = vpop.f32.mrf.mxu0
        %v592 = vadd.f32 0.0, %v591
        %593 = vmatmul.bf16.gmra.mxu0 %v497
        %v594 = vpop.f32.mrf.mxu0
        %v595 = vadd.f32 0.0, %v594
        %v596 = vpop.f32.mrf.mxu0
        %v597 = vadd.f32 0.0, %v596
        %598 = vmatmul.bf16.gmra.mxu0 %v498
        %v599 = vpop.f32.mrf.mxu0
        %v600 = vadd.f32 0.0, %v599
        %v601 = vpop.f32.mrf.mxu0
        %v602 = vadd.f32 0.0, %v601
        %603 = vdwg.mxu0
        %v604 = vadd.f32 %v411, %v565
        %v605 = vadd.f32 %v412, %v567
        %v606 = vadd.f32 %v413, %v570
        %v607 = vadd.f32 %v414, %v572
        %v608 = vadd.f32 %v415, %v575
        %v609 = vadd.f32 %v416, %v577
        %v610 = vadd.f32 %v417, %v580
        %v611 = vadd.f32 %v418, %v582
        %v612 = vadd.f32 %v419, %v585
        %v613 = vadd.f32 %v420, %v587
        %v614 = vadd.f32 %v421, %v590
        %v615 = vadd.f32 %v422, %v592
        %v616 = vadd.f32 %v423, %v595
        %v617 = vadd.f32 %v424, %v597
        %v618 = vadd.f32 %v425, %v600
        %v619 = vadd.f32 %v426, %v602
        %620 = vst [vmem:[#allocation2] sm:$0xff] %v604
        %621 = vst [vmem:[#allocation2 + $0x8] sm:$0xff] %v605
        %622 = vst [vmem:[#allocation2 + $0x10] sm:$0xff] %v606
        %623 = vst [vmem:[#allocation2 + $0x18] sm:$0xff] %v607
        %624 = vst [vmem:[#allocation2 + $0x20] sm:$0xff] %v608
        %625 = vst [vmem:[#allocation2 + $0x28] sm:$0xff] %v609
        %626 = vst [vmem:[#allocation2 + $0x30] sm:$0xff] %v610
        %627 = vst [vmem:[#allocation2 + $0x38] sm:$0xff] %v611
        %628 = vst [vmem:[#allocation2 + $0x40] sm:$0xff] %v612
        %629 = vst [vmem:[#allocation2 + $0x48] sm:$0xff] %v613
        %630 = vst [vmem:[#allocation2 + $0x50] sm:$0xff] %v614
        %631 = vst [vmem:[#allocation2 + $0x58] sm:$0xff] %v615
        %632 = vst [vmem:[#allocation2 + $0x60] sm:$0xff] %v616
        %633 = vst [vmem:[#allocation2 + $0x68] sm:$0xff] %v617
        %634 = vst [vmem:[#allocation2 + $0x70] sm:$0xff] %v618
        %635 = vst [vmem:[#allocation2 + $0x78] sm:$0xff] %v619
        %p636 = scmp.eq.s32.totalorder %s21, 1
        // Predicated region
        $region86: #{gnn_forward.3} parent=76 // pred_check
          %p637 = pneg %p636
        $region87: #{gnn_forward.3} parent=76 // pred_check_branch
          %639 = sbr.rel (%p637) target = $region89
        $region88: #{gnn_forward.3} parent=76 // pred_region
          %v640 = vld [vmem:[#allocation2] sm:$0xff]
          %v641 = vld [vmem:[#allocation2 + $0x8] sm:$0xff]
          %v642 = vld [vmem:[#allocation2 + $0x10] sm:$0xff]
          %v643 = vld [vmem:[#allocation2 + $0x18] sm:$0xff]
          %v644 = vld [vmem:[#allocation2 + $0x20] sm:$0xff]
          %v645 = vld [vmem:[#allocation2 + $0x28] sm:$0xff]
          %v646 = vld [vmem:[#allocation2 + $0x30] sm:$0xff]
          %v647 = vld [vmem:[#allocation2 + $0x38] sm:$0xff]
          %v648 = vld [vmem:[#allocation2 + $0x40] sm:$0xff]
          %v649 = vld [vmem:[#allocation2 + $0x48] sm:$0xff]
          %v650 = vld [vmem:[#allocation2 + $0x50] sm:$0xff]
          %v651 = vld [vmem:[#allocation2 + $0x58] sm:$0xff]
          %v652 = vld [vmem:[#allocation2 + $0x60] sm:$0xff]
          %v653 = vld [vmem:[#allocation2 + $0x68] sm:$0xff]
          %v654 = vld [vmem:[#allocation2 + $0x70] sm:$0xff]
          %v655 = vld [vmem:[#allocation2 + $0x78] sm:$0xff]
          %v656 = vpack.c.bf16 %v640, %v640
          %v657 = vpack.c.bf16 %v641, %v641
          %v658 = vpack.c.bf16 %v642, %v642
          %v659 = vpack.c.bf16 %v643, %v643
          %v660 = vpack.c.bf16 %v644, %v644
          %v661 = vpack.c.bf16 %v645, %v645
          %v662 = vpack.c.bf16 %v646, %v646
          %v663 = vpack.c.bf16 %v647, %v647
          %v664 = vpack.c.bf16 %v648, %v648
          %v665 = vpack.c.bf16 %v649, %v649
          %v666 = vpack.c.bf16 %v650, %v650
          %v667 = vpack.c.bf16 %v651, %v651
          %v668 = vpack.c.bf16 %v652, %v652
          %v669 = vpack.c.bf16 %v653, %v653
          %v670 = vpack.c.bf16 %v654, %v654
          %v671 = vpack.c.bf16 %v655, %v655
          %v672 = vld [vmem:[%s383] sm:$0xf]
          %v673 = vld [vmem:[%s383 + $0x4] sm:$0xf]
          %v674 = vld [vmem:[%s383 + $0x8] sm:$0xf]
          %v675 = vld [vmem:[%s383 + $0xc] sm:$0xf]
          %v676 = vld [vmem:[%s383 + $0x10] sm:$0xf]
          %v677 = vld [vmem:[%s383 + $0x14] sm:$0xf]
          %v678 = vld [vmem:[%s383 + $0x18] sm:$0xf]
          %v679 = vld [vmem:[%s383 + $0x1c] sm:$0xf]
          %v680 = vld [vmem:[%s383 + $0x20] sm:$0xf]
          %v681 = vld [vmem:[%s383 + $0x24] sm:$0xf]
          %v682 = vld [vmem:[%s383 + $0x28] sm:$0xf]
          %v683 = vld [vmem:[%s383 + $0x2c] sm:$0xf]
          %v684 = vld [vmem:[%s383 + $0x30] sm:$0xf]
          %v685 = vld [vmem:[%s383 + $0x34] sm:$0xf]
          %v686 = vld [vmem:[%s383 + $0x38] sm:$0xf]
          %v687 = vld [vmem:[%s383 + $0x3c] sm:$0xf]
          %v704 = vunpack.c.l.b16 %v656
          %v705 = vunpack.c.l.b16 %v657
          %v706 = vunpack.c.l.b16 %v658
          %v707 = vunpack.c.l.b16 %v659
          %v708 = vunpack.c.l.b16 %v660
          %v709 = vunpack.c.l.b16 %v661
          %v710 = vunpack.c.l.b16 %v662
          %v711 = vunpack.c.l.b16 %v663
          %v712 = vunpack.c.l.b16 %v664
          %v713 = vunpack.c.l.b16 %v665
          %v714 = vunpack.c.l.b16 %v666
          %v715 = vunpack.c.l.b16 %v667
          %v716 = vunpack.c.l.b16 %v668
          %v717 = vunpack.c.l.b16 %v669
          %v718 = vunpack.c.l.b16 %v670
          %v719 = vunpack.c.l.b16 %v671
          %v720 = vpack.c.b16 %v705, %v704
          %v721 = vpack.c.b16 %v707, %v706
          %v722 = vpack.c.b16 %v709, %v708
          %v723 = vpack.c.b16 %v711, %v710
          %v724 = vpack.c.b16 %v713, %v712
          %v725 = vpack.c.b16 %v715, %v714
          %v726 = vpack.c.b16 %v717, %v716
          %v727 = vpack.c.b16 %v719, %v718
          %v752 = vunpack.c.l.b16 %v672
          %v753 = vunpack.c.l.b16 %v673
          %v754 = vunpack.c.l.b16 %v674
          %v755 = vunpack.c.l.b16 %v675
          %v756 = vunpack.c.l.b16 %v676
          %v757 = vunpack.c.l.b16 %v677
          %v758 = vunpack.c.l.b16 %v678
          %v759 = vunpack.c.l.b16 %v679
          %v760 = vunpack.c.l.b16 %v680
          %v761 = vunpack.c.l.b16 %v681
          %v762 = vunpack.c.l.b16 %v682
          %v763 = vunpack.c.l.b16 %v683
          %v764 = vunpack.c.l.b16 %v684
          %v765 = vunpack.c.l.b16 %v685
          %v766 = vunpack.c.l.b16 %v686
          %v767 = vunpack.c.l.b16 %v687
          %v768 = vpack.c.b16 %v753, %v752
          %v769 = vpack.c.b16 %v755, %v754
          %v770 = vpack.c.b16 %v757, %v756
          %v771 = vpack.c.b16 %v759, %v758
          %v772 = vpack.c.b16 %v761, %v760
          %v773 = vpack.c.b16 %v763, %v762
          %v774 = vpack.c.b16 %v765, %v764
          %v775 = vpack.c.b16 %v767, %v766
          %v784 = vld [vmem:[%s3] sm:$0xf]
          %v785 = vld [vmem:[%s3 + $0x4] sm:$0xf]
          %v786 = vld [vmem:[%s3 + $0x8] sm:$0xf]
          %v787 = vld [vmem:[%s3 + $0xc] sm:$0xf]
          %v788 = vld [vmem:[%s3 + $0x10] sm:$0xf]
          %v789 = vld [vmem:[%s3 + $0x14] sm:$0xf]
          %v790 = vld [vmem:[%s3 + $0x18] sm:$0xf]
          %v791 = vld [vmem:[%s3 + $0x1c] sm:$0xf]
          %v792 = vld [vmem:[%s3 + $0x20] sm:$0xf]
          %v793 = vld [vmem:[%s3 + $0x24] sm:$0xf]
          %v794 = vld [vmem:[%s3 + $0x28] sm:$0xf]
          %v795 = vld [vmem:[%s3 + $0x2c] sm:$0xf]
          %v796 = vld [vmem:[%s3 + $0x30] sm:$0xf]
          %v797 = vld [vmem:[%s3 + $0x34] sm:$0xf]
          %v798 = vld [vmem:[%s3 + $0x38] sm:$0xf]
          %v799 = vld [vmem:[%s3 + $0x3c] sm:$0xf]
          %v800 = vld [vmem:[%s3 + $0x40] sm:$0xf]
          %v801 = vld [vmem:[%s3 + $0x44] sm:$0xf]
          %v802 = vld [vmem:[%s3 + $0x48] sm:$0xf]
          %v803 = vld [vmem:[%s3 + $0x4c] sm:$0xf]
          %v804 = vld [vmem:[%s3 + $0x50] sm:$0xf]
          %v805 = vld [vmem:[%s3 + $0x54] sm:$0xf]
          %v806 = vld [vmem:[%s3 + $0x58] sm:$0xf]
          %v807 = vld [vmem:[%s3 + $0x5c] sm:$0xf]
          %v808 = vld [vmem:[%s3 + $0x60] sm:$0xf]
          %v809 = vld [vmem:[%s3 + $0x64] sm:$0xf]
          %v810 = vld [vmem:[%s3 + $0x68] sm:$0xf]
          %v811 = vld [vmem:[%s3 + $0x6c] sm:$0xf]
          %v812 = vld [vmem:[%s3 + $0x70] sm:$0xf]
          %v813 = vld [vmem:[%s3 + $0x74] sm:$0xf]
          %v814 = vld [vmem:[%s3 + $0x78] sm:$0xf]
          %v815 = vld [vmem:[%s3 + $0x7c] sm:$0xf]
          %v816 = vld [vmem:[%s4] sm:$0x1]
          %v818 = vperm.slane %v816, 0
          %v852 = vunpack.c.l.b16 %v784
          %v853 = vunpack.c.l.b16 %v785
          %v854 = vunpack.c.l.b16 %v786
          %v855 = vunpack.c.l.b16 %v787
          %v856 = vunpack.c.l.b16 %v788
          %v857 = vunpack.c.l.b16 %v789
          %v858 = vunpack.c.l.b16 %v790
          %v859 = vunpack.c.l.b16 %v791
          %v860 = vunpack.c.l.b16 %v792
          %v861 = vunpack.c.l.b16 %v793
          %v862 = vunpack.c.l.b16 %v794
          %v863 = vunpack.c.l.b16 %v795
          %v864 = vunpack.c.l.b16 %v796
          %v865 = vunpack.c.l.b16 %v797
          %v866 = vunpack.c.l.b16 %v798
          %v867 = vunpack.c.l.b16 %v799
          %v868 = vunpack.c.l.b16 %v800
          %v869 = vunpack.c.l.b16 %v801
          %v870 = vunpack.c.l.b16 %v802
          %v871 = vunpack.c.l.b16 %v803
          %v872 = vunpack.c.l.b16 %v804
          %v873 = vunpack.c.l.b16 %v805
          %v874 = vunpack.c.l.b16 %v806
          %v875 = vunpack.c.l.b16 %v807
          %v876 = vunpack.c.l.b16 %v808
          %v877 = vunpack.c.l.b16 %v809
          %v878 = vunpack.c.l.b16 %v810
          %v879 = vunpack.c.l.b16 %v811
          %v880 = vunpack.c.l.b16 %v812
          %v881 = vunpack.c.l.b16 %v813
          %v882 = vunpack.c.l.b16 %v814
          %v883 = vunpack.c.l.b16 %v815
          %v884 = vpack.c.b16 %v853, %v852
          %v885 = vpack.c.b16 %v855, %v854
          %v886 = vpack.c.b16 %v857, %v856
          %v887 = vpack.c.b16 %v859, %v858
          %v888 = vpack.c.b16 %v861, %v860
          %v889 = vpack.c.b16 %v863, %v862
          %v890 = vpack.c.b16 %v865, %v864
          %v891 = vpack.c.b16 %v867, %v866
          %v892 = vpack.c.b16 %v869, %v868
          %v893 = vpack.c.b16 %v871, %v870
          %v894 = vpack.c.b16 %v873, %v872
          %v895 = vpack.c.b16 %v875, %v874
          %v896 = vpack.c.b16 %v877, %v876
          %v897 = vpack.c.b16 %v879, %v878
          %v898 = vpack.c.b16 %v881, %v880
          %v899 = vpack.c.b16 %v883, %v882
          %916 = vmatpush.bf16.msra.mxu0 %v891
          %917 = vmatpush.bf16.msra.mxu0 %v890
          %918 = vmatpush.bf16.msra.mxu0 %v889
          %919 = vmatpush.bf16.msra.mxu0 %v888
          %920 = vmatpush.bf16.msra.mxu0 %v887
          %921 = vmatpush.bf16.msra.mxu0 %v886
          %922 = vmatpush.bf16.msra.mxu0 %v885
          %923 = vmatpush.bf16.msra.mxu0 %v884
          %924 = vmatmul.bf16.gmra.mxu0 %v720
          %v925 = vpop.f32.mrf.mxu0
          %v926 = vadd.f32 %v818, %v925
          %v927 = vpop.f32.mrf.mxu0
          %v928 = vadd.f32 %v818, %v927
          %929 = vmatmul.bf16.gmra.mxu0 %v721
          %v930 = vpop.f32.mrf.mxu0
          %v931 = vadd.f32 %v818, %v930
          %v932 = vpop.f32.mrf.mxu0
          %v933 = vadd.f32 %v818, %v932
          %934 = vmatmul.bf16.gmra.mxu0 %v722
          %v935 = vpop.f32.mrf.mxu0
          %v936 = vadd.f32 %v818, %v935
          %v937 = vpop.f32.mrf.mxu0
          %v938 = vadd.f32 %v818, %v937
          %939 = vmatmul.bf16.gmra.mxu0 %v723
          %v940 = vpop.f32.mrf.mxu0
          %v941 = vadd.f32 %v818, %v940
          %v942 = vpop.f32.mrf.mxu0
          %v943 = vadd.f32 %v818, %v942
          %944 = vmatmul.bf16.gmra.mxu0 %v724
          %v945 = vpop.f32.mrf.mxu0
          %v946 = vadd.f32 %v818, %v945
          %v947 = vpop.f32.mrf.mxu0
          %v948 = vadd.f32 %v818, %v947
          %949 = vmatmul.bf16.gmra.mxu0 %v725
          %v950 = vpop.f32.mrf.mxu0
          %v951 = vadd.f32 %v818, %v950
          %v952 = vpop.f32.mrf.mxu0
          %v953 = vadd.f32 %v818, %v952
          %954 = vmatmul.bf16.gmra.mxu0 %v726
          %v955 = vpop.f32.mrf.mxu0
          %v956 = vadd.f32 %v818, %v955
          %v957 = vpop.f32.mrf.mxu0
          %v958 = vadd.f32 %v818, %v957
          %959 = vmatmul.bf16.gmra.mxu0 %v727
          %v960 = vpop.f32.mrf.mxu0
          %v961 = vadd.f32 %v818, %v960
          %v962 = vpop.f32.mrf.mxu0
          %v963 = vadd.f32 %v818, %v962
          %964 = vdwg.mxu0
          %965 = vmatpush.bf16.msra.mxu0 %v899
          %966 = vmatpush.bf16.msra.mxu0 %v898
          %967 = vmatpush.bf16.msra.mxu0 %v897
          %968 = vmatpush.bf16.msra.mxu0 %v896
          %969 = vmatpush.bf16.msra.mxu0 %v895
          %970 = vmatpush.bf16.msra.mxu0 %v894
          %971 = vmatpush.bf16.msra.mxu0 %v893
          %972 = vmatpush.bf16.msra.mxu0 %v892
          %973 = vmatmul.bf16.gmra.mxu0 %v768
          %v974 = vpop.f32.mrf.mxu0
          %v975 = vadd.f32 %v926, %v974
          %v976 = vpop.f32.mrf.mxu0
          %v977 = vadd.f32 %v928, %v976
          %978 = vmatmul.bf16.gmra.mxu0 %v769
          %v979 = vpop.f32.mrf.mxu0
          %v980 = vadd.f32 %v931, %v979
          %v981 = vpop.f32.mrf.mxu0
          %v982 = vadd.f32 %v933, %v981
          %983 = vmatmul.bf16.gmra.mxu0 %v770
          %v984 = vpop.f32.mrf.mxu0
          %v985 = vadd.f32 %v936, %v984
          %v986 = vpop.f32.mrf.mxu0
          %v987 = vadd.f32 %v938, %v986
          %988 = vmatmul.bf16.gmra.mxu0 %v771
          %v989 = vpop.f32.mrf.mxu0
          %v990 = vadd.f32 %v941, %v989
          %v991 = vpop.f32.mrf.mxu0
          %v992 = vadd.f32 %v943, %v991
          %993 = vmatmul.bf16.gmra.mxu0 %v772
          %v994 = vpop.f32.mrf.mxu0
          %v995 = vadd.f32 %v946, %v994
          %v996 = vpop.f32.mrf.mxu0
          %v997 = vadd.f32 %v948, %v996
          %998 = vmatmul.bf16.gmra.mxu0 %v773
          %v999 = vpop.f32.mrf.mxu0
          %v1000 = vadd.f32 %v951, %v999
          %v1001 = vpop.f32.mrf.mxu0
          %v1002 = vadd.f32 %v953, %v1001
          %1003 = vmatmul.bf16.gmra.mxu0 %v774
          %v1004 = vpop.f32.mrf.mxu0
          %v1005 = vadd.f32 %v956, %v1004
          %v1006 = vpop.f32.mrf.mxu0
          %v1007 = vadd.f32 %v958, %v1006
          %1008 = vmatmul.bf16.gmra.mxu0 %v775
          %v1009 = vpop.f32.mrf.mxu0
          %v1010 = vadd.f32 %v961, %v1009
          %v1011 = vpop.f32.mrf.mxu0
          %v1012 = vadd.f32 %v963, %v1011
          %1013 = vdwg.mxu0
          %v1014 = vmax.f32 %v975, 0.0
          %v1015 = vmax.f32 %v977, 0.0
          %v1016 = vmax.f32 %v980, 0.0
          %v1017 = vmax.f32 %v982, 0.0
          %v1018 = vmax.f32 %v985, 0.0
          %v1019 = vmax.f32 %v987, 0.0
          %v1020 = vmax.f32 %v990, 0.0
          %v1021 = vmax.f32 %v992, 0.0
          %v1022 = vmax.f32 %v995, 0.0
          %v1023 = vmax.f32 %v997, 0.0
          %v1024 = vmax.f32 %v1000, 0.0
          %v1025 = vmax.f32 %v1002, 0.0
          %v1026 = vmax.f32 %v1005, 0.0
          %v1027 = vmax.f32 %v1007, 0.0
          %v1028 = vmax.f32 %v1010, 0.0
          %v1029 = vmax.f32 %v1012, 0.0
          %v1030 = vpack.c.bf16 %v1014, %v1014
          %v1031 = vpack.c.bf16 %v1015, %v1015
          %v1032 = vpack.c.bf16 %v1016, %v1016
          %v1033 = vpack.c.bf16 %v1017, %v1017
          %v1034 = vpack.c.bf16 %v1018, %v1018
          %v1035 = vpack.c.bf16 %v1019, %v1019
          %v1036 = vpack.c.bf16 %v1020, %v1020
          %v1037 = vpack.c.bf16 %v1021, %v1021
          %v1038 = vpack.c.bf16 %v1022, %v1022
          %v1039 = vpack.c.bf16 %v1023, %v1023
          %v1040 = vpack.c.bf16 %v1024, %v1024
          %v1041 = vpack.c.bf16 %v1025, %v1025
          %v1042 = vpack.c.bf16 %v1026, %v1026
          %v1043 = vpack.c.bf16 %v1027, %v1027
          %v1044 = vpack.c.bf16 %v1028, %v1028
          %v1045 = vpack.c.bf16 %v1029, %v1029
          %1046 = vst [vmem:[%s389] sm:$0xf] %v1030
          %1047 = vst [vmem:[%s389 + $0x4] sm:$0xf] %v1031
          %1048 = vst [vmem:[%s389 + $0x8] sm:$0xf] %v1032
          %1049 = vst [vmem:[%s389 + $0xc] sm:$0xf] %v1033
          %1050 = vst [vmem:[%s389 + $0x10] sm:$0xf] %v1034
          %1051 = vst [vmem:[%s389 + $0x14] sm:$0xf] %v1035
          %1052 = vst [vmem:[%s389 + $0x18] sm:$0xf] %v1036
          %1053 = vst [vmem:[%s389 + $0x1c] sm:$0xf] %v1037
          %1054 = vst [vmem:[%s389 + $0x20] sm:$0xf] %v1038
          %1055 = vst [vmem:[%s389 + $0x24] sm:$0xf] %v1039
          %1056 = vst [vmem:[%s389 + $0x28] sm:$0xf] %v1040
          %1057 = vst [vmem:[%s389 + $0x2c] sm:$0xf] %v1041
          %1058 = vst [vmem:[%s389 + $0x30] sm:$0xf] %v1042
          %1059 = vst [vmem:[%s389 + $0x34] sm:$0xf] %v1043
          %1060 = vst [vmem:[%s389 + $0x38] sm:$0xf] %v1044
          %1061 = vst [vmem:[%s389 + $0x3c] sm:$0xf] %v1045
        $region89: #{gnn_forward.3} parent=76 // pred_fallthru
          _
        %s1062 = smul.u32 16, %s20
        %p1063 = scmp.lt.s32.totalorder %s1062, 31
        %s1064 = scalar_select %p1063, %s1062, 31
        %s1065 = smul.addr %s1064, 4
        %s1066 = scalar_lea.vmem %s5, %s1065
        // Predicated region
        $region90: #{gnn_forward.3} parent=76 // pred_check
          %p1067 = pneg %p168
        $region91: #{gnn_forward.3} parent=76 // pred_check_branch
          %1069 = sbr.rel (%p1067) target = $region93
        $region92: #{gnn_forward.3} parent=76 // pred_region
          %s1070 = smul.u32 16, %s20
        $region93: #{gnn_forward.3} parent=76 // pred_fallthru
          _
      $region77: #{gnn_forward.3} parent=5 // pred_fallthru
        _
      %p1071 = scmp.le.s32.totalorder 2, %s11
      // Predicated region
      $region94: #{gnn_forward.3} parent=5 // pred_check
        %p1072 = pneg %p1071
      $region95: #{gnn_forward.3} parent=5 // pred_check_branch
        %1074 = sbr.rel (%p1072) target = $region97
      $region96: #{gnn_forward.3} parent=5 // pred_region
        %s1075 = ssub.s32 %s11, 2
        // Predicated region
        $region98: #{gnn_forward.3} parent=96 // pred_check
          %p1076 = pneg %p174
        $region99: #{gnn_forward.3} parent=96 // pred_check_branch
          %1078 = sbr.rel (%p1076) target = $region101
        $region100: #{gnn_forward.3} parent=96 // pred_region
          %s1079 = smul.u32 16, %s22
          %p1080 = scmp.lt.s32.totalorder %s1079, 31
          %s1081 = scalar_select %p1080, %s1079, 31
          %s1082 = smul.addr %s1081, 4
          %s1083 = scalar_lea.vmem %s5, %s1082
        $region101: #{gnn_forward.3} parent=96 // pred_fallthru
          _
      $region97: #{gnn_forward.3} parent=5 // pred_fallthru
        _
    $region6: #{gnn_forward.3} parent=1 // loop_footer
      %s15 = sadd.s32 1, %s11
    $region7: #{gnn_forward.3} parent=1 // loop_footer_branch
      %10 = sbr.rel target = $region3
    $region8: #{gnn_forward.3} parent=1 // loop_exit
      _

// kernel: gnn_forward.5
$region0: #{gnn_forward.5}
  #allocation0 [shape = 'u32[]', space=smem, size = 0x4, offset = 0x4, fixed_abs, tag = 'smem constant byte address 0x4 - core index']
  #allocation1 [shape = 'u32[72,128]{1,0:T(1,128)}', space=vmem, size = 0x9000, scoped, tag = 'internal scratch']
  #allocation2 [shape = 'f32[128,128]{1,0:T(8,128)}', space=vmem, size = 0x10000, scoped, tag = 'scratch operand']
  %s0 = inlined_call_operand.vmem [shape: bf16[256,256], index: 0, kind: input, shape index: {}]
  %s1 = inlined_call_operand.vmem [shape: bf16[256,128], index: 1, kind: input, shape index: {}, may-alias: {1,2}]
  %s2 = inlined_call_operand.vmem [shape: bf16[256,128], index: 2, kind: input, shape index: {}, may-alias: {1,2}]
  %s3 = inlined_call_operand.vmem [shape: bf16[256,128], index: 3, kind: input, shape index: {}]
  %s4 = inlined_call_operand.vmem [shape: f32[1,128], index: 4, kind: input, shape index: {}]
  %s5 = inlined_call_operand.vmem [shape: f32[256,128], index: 5, kind: output, shape index: {}]
  %s6 = sld [smem:[#allocation0]]
  $region102: #{gnn_forward.5} parent=0
    _
  %s8 = ssub.s32 1, %s6
  %s9 = scalar_select 0, %s8, %s6
  $region1: #{gnn_forward.5} parent=0
    #allocation3 [shape = 'u8[65536]{0}', space=vmem, size = 0x10000, scoped, tag = 'input window, operand 0']
    loop: start=0, step=1, limit=6
    $region2: #{gnn_forward.5} parent=1 // loop_pre_header
      _
    $region3: #{gnn_forward.5} parent=1 // loop_header
      %s11 = sphi 0, %s15
      %p12 = scmp.ge.s32.totalorder %s11, 6
      %s18 = sphi 0, %s30
      %s19 = sphi 0, %s26
      %s20 = sphi 0, %s18
      %s21 = sphi 0, %s19
      %s22 = sphi 0, %s20
      %s23 = sphi 0, %s21
      %s35 = sphi 0, %s37
      %s38 = sphi 0, %s35
      %s39 = sphi 0, %s38
      %s55 = sphi 0, %s39
      %s61 = sphi 0, %s63
      %s64 = sphi 0, %s61
      %s65 = sphi 0, %s64
      %s81 = sphi 0, %s65
      %s87 = sphi 0, %s89
      %s90 = sphi 0, %s87
      %s91 = sphi 0, %s90
      %s107 = sphi 0, %s91
      %s111 = sphi 0, %s111
      %s113 = sphi 0, %s111
      %s114 = sphi 0, %s113
      %s128 = sphi 0, %s114
      %s132 = sphi 0, %s132
      %s134 = sphi 0, %s132
      %s135 = sphi 0, %s134
      %s149 = sphi 0, %s135
      %s155 = sphi 0, %s157
      %s158 = sphi 0, %s155
      %s159 = sphi 0, %s158
      %s175 = sphi 0, %s159
    $region4: #{gnn_forward.5} parent=1 // loop_header_branch
      %14 = sbr.rel (%p12) target = $region8
    $region5: #{gnn_forward.5} parent=1 // loop_body
      %s16 = ssub.s32 %s11, 1
      %s17 = ssub.s32 %s11, 2
      %s24 = sadd.s32 1, %s19
      %p25 = scmp.ge.s32.totalorder %s24, 2
      %s26 = scalar_select %p25, 0, %s24
      %s27 = sadd.s32 1, %s18
      %s28 = scalar_select %p25, %s27, %s18
      %p29 = scmp.ge.s32.totalorder %s28, 2
      %s30 = scalar_select %p29, 0, %s28
      %s31 = ssub.s32 %s18, %s30
      %s32 = ssub.s32 %s19, %s26
      %s33 = sor.u32 %s31, %s32
      %p34 = scmp.eq.s32.totalorder %s33, 0
      %s36 = sadd.s32 %s35, 1
      %s37 = scalar_select %p34, %s35, %s36
      %p40 = pneg %p34
      %p41 = scmp.eq.s32.totalorder %s11, 3
      %p42 = por %p40, %p41
      %p43 = scmp.ne.s32.totalorder %s35, %s38
      %p44 = scmp.eq.s32.totalorder %s11, 0
      %p45 = por %p43, %p44
      %p46 = scmp.ne.s32.totalorder %s35, %s38
      %p47 = scmp.eq.s32.totalorder %s16, 3
      %p48 = por %p46, %p47
      %p49 = scmp.ne.s32.totalorder %s38, %s39
      %p50 = scmp.eq.s32.totalorder %s16, 0
      %p51 = por %p49, %p50
      %p52 = scmp.ne.s32.totalorder %s38, %s39
      %p53 = scmp.eq.s32.totalorder %s17, 3
      %p54 = por %p52, %p53
      %p56 = scmp.ne.s32.totalorder %s39, %s55
      %p57 = scmp.eq.s32.totalorder %s17, 0
      %p58 = por %p56, %p57
      %s59 = ssub.s32 %s19, %s26
      %p60 = scmp.eq.s32.totalorder %s59, 0
      %s62 = sadd.s32 %s61, 1
      %s63 = scalar_select %p60, %s61, %s62
      %p66 = pneg %p60
      %p67 = scmp.eq.s32.totalorder %s11, 3
      %p68 = por %p66, %p67
      %p69 = scmp.ne.s32.totalorder %s61, %s64
      %p70 = scmp.eq.s32.totalorder %s11, 0
      %p71 = por %p69, %p70
      %p72 = scmp.ne.s32.totalorder %s61, %s64
      %p73 = scmp.eq.s32.totalorder %s16, 3
      %p74 = por %p72, %p73
      %p75 = scmp.ne.s32.totalorder %s64, %s65
      %p76 = scmp.eq.s32.totalorder %s16, 0
      %p77 = por %p75, %p76
      %p78 = scmp.ne.s32.totalorder %s64, %s65
      %p79 = scmp.eq.s32.totalorder %s17, 3
      %p80 = por %p78, %p79
      %p82 = scmp.ne.s32.totalorder %s65, %s81
      %p83 = scmp.eq.s32.totalorder %s17, 0
      %p84 = por %p82, %p83
      %s85 = ssub.s32 %s18, %s30
      %p86 = scmp.eq.s32.totalorder %s85, 0
      %s88 = sadd.s32 %s87, 1
      %s89 = scalar_select %p86, %s87, %s88
      %p92 = pneg %p86
      %p93 = scmp.eq.s32.totalorder %s11, 3
      %p94 = por %p92, %p93
      %p95 = scmp.ne.s32.totalorder %s87, %s90
      %p96 = scmp.eq.s32.totalorder %s11, 0
      %p97 = por %p95, %p96
      %p98 = scmp.ne.s32.totalorder %s87, %s90
      %p99 = scmp.eq.s32.totalorder %s16, 3
      %p100 = por %p98, %p99
      %p101 = scmp.ne.s32.totalorder %s90, %s91
      %p102 = scmp.eq.s32.totalorder %s16, 0
      %p103 = por %p101, %p102
      %p104 = scmp.ne.s32.totalorder %s90, %s91
      %p105 = scmp.eq.s32.totalorder %s17, 3
      %p106 = por %p104, %p105
      %p108 = scmp.ne.s32.totalorder %s91, %s107
      %p109 = scmp.eq.s32.totalorder %s17, 0
      %p110 = por %p108, %p109
      %s112 = sadd.s32 %s111, 1
      %p115 = scmp.eq.s32.totalorder %s11, 3
      %p116 = scmp.ne.s32.totalorder %s111, %s113
      %p117 = scmp.eq.s32.totalorder %s11, 0
      %p118 = por %p116, %p117
      %p119 = scmp.ne.s32.totalorder %s111, %s113
      %p120 = scmp.eq.s32.totalorder %s16, 3
      %p121 = por %p119, %p120
      %p122 = scmp.ne.s32.totalorder %s113, %s114
      %p123 = scmp.eq.s32.totalorder %s16, 0
      %p124 = por %p122, %p123
      %p125 = scmp.ne.s32.totalorder %s113, %s114
      %p126 = scmp.eq.s32.totalorder %s17, 3
      %p127 = por %p125, %p126
      %p129 = scmp.ne.s32.totalorder %s114, %s128
      %p130 = scmp.eq.s32.totalorder %s17, 0
      %p131 = por %p129, %p130
      %s133 = sadd.s32 %s132, 1
      %p136 = scmp.eq.s32.totalorder %s11, 3
      %p137 = scmp.ne.s32.totalorder %s132, %s134
      %p138 = scmp.eq.s32.totalorder %s11, 0
      %p139 = por %p137, %p138
      %p140 = scmp.ne.s32.totalorder %s132, %s134
      %p141 = scmp.eq.s32.totalorder %s16, 3
      %p142 = por %p140, %p141
      %p143 = scmp.ne.s32.totalorder %s134, %s135
      %p144 = scmp.eq.s32.totalorder %s16, 0
      %p145 = por %p143, %p144
      %p146 = scmp.ne.s32.totalorder %s134, %s135
      %p147 = scmp.eq.s32.totalorder %s17, 3
      %p148 = por %p146, %p147
      %p150 = scmp.ne.s32.totalorder %s135, %s149
      %p151 = scmp.eq.s32.totalorder %s17, 0
      %p152 = por %p150, %p151
      %s153 = ssub.s32 %s18, %s30
      %p154 = scmp.eq.s32.totalorder %s153, 0
      %s156 = sadd.s32 %s155, 1
      %s157 = scalar_select %p154, %s155, %s156
      %p160 = pneg %p154
      %p161 = scmp.eq.s32.totalorder %s11, 3
      %p162 = por %p160, %p161
      %p163 = scmp.ne.s32.totalorder %s155, %s158
      %p164 = scmp.eq.s32.totalorder %s11, 0
      %p165 = por %p163, %p164
      %p166 = scmp.ne.s32.totalorder %s155, %s158
      %p167 = scmp.eq.s32.totalorder %s16, 3
      %p168 = por %p166, %p167
      %p169 = scmp.ne.s32.totalorder %s158, %s159
      %p170 = scmp.eq.s32.totalorder %s16, 0
      %p171 = por %p169, %p170
      %p172 = scmp.ne.s32.totalorder %s158, %s159
      %p173 = scmp.eq.s32.totalorder %s17, 3
      %p174 = por %p172, %p173
      %p176 = scmp.ne.s32.totalorder %s159, %s175
      %p177 = scmp.eq.s32.totalorder %s17, 0
      %p178 = por %p176, %p177
      %p179 = scmp.le.s32.totalorder 1, %s11
      %p180 = scmp.lt.s32.totalorder %s11, 5
      %p181 = pnand %p179, %p180
      %p182 = pneg %p181
      // Predicated region
      $region9: #{gnn_forward.5} parent=5 // pred_check
        _
      $region10: #{gnn_forward.5} parent=5 // pred_check_branch
        %184 = sbr.rel (%p181) target = $region12
      $region11: #{gnn_forward.5} parent=5 // pred_region
        %s185 = ssub.s32 %s11, 1
        // Predicated region
        $region13: #{gnn_forward.5} parent=11 // pred_check
          %p186 = pneg %p124
        $region14: #{gnn_forward.5} parent=11 // pred_check_branch
          %188 = sbr.rel (%p186) target = $region16
        $region15: #{gnn_forward.5} parent=11 // pred_region
          _
        $region16: #{gnn_forward.5} parent=11 // pred_fallthru
          _
        // Predicated region
        $region17: #{gnn_forward.5} parent=11 // pred_check
          %p189 = pneg %p145
        $region18: #{gnn_forward.5} parent=11 // pred_check_branch
          %191 = sbr.rel (%p189) target = $region20
        $region19: #{gnn_forward.5} parent=11 // pred_region
          _
        $region20: #{gnn_forward.5} parent=11 // pred_fallthru
          _
      $region12: #{gnn_forward.5} parent=5 // pred_fallthru
        _
      %p192 = scmp.lt.s32.totalorder %s11, 4
      // Predicated region
      $region21: #{gnn_forward.5} parent=5 // pred_check
        %p193 = pneg %p192
      $region22: #{gnn_forward.5} parent=5 // pred_check_branch
        %195 = sbr.rel (%p193) target = $region24
      $region23: #{gnn_forward.5} parent=5 // pred_region
        // Predicated region
        $region25: #{gnn_forward.5} parent=23 // pred_check
          %p196 = pneg %p45
        $region26: #{gnn_forward.5} parent=23 // pred_check_branch
          %198 = sbr.rel (%p196) target = $region28
        $region27: #{gnn_forward.5} parent=23 // pred_region
          %s199 = sand.u32 %s35, 1
          %s200 = sand.u32 %s35, 1
          %s201 = smul.addr %s200, 64
          %s202 = scalar_lea.vmem [#allocation3], %s201
          %s203 = smul.u32 16, %s18
          %s204 = smul.addr %s203, 2
          %s205 = sadd.s32 %s19, %s204
          %s206 = smul.addr %s205, 4
          %s207 = scalar_lea.vmem %s0, %s206
          // Predicated region
          $region29: #{gnn_forward.5} parent=27 // pred_check
            _
          $region30: #{gnn_forward.5} parent=27 // pred_check_branch
            %209 = sbr.rel (0) target = $region32
          $region31: #{gnn_forward.5} parent=27 // pred_region
            // Predicated region
            $region33: #{gnn_forward.5} parent=31 // pred_check
              _
            $region34: #{gnn_forward.5} parent=31 // pred_check_branch
              %211 = sbr.rel target = $region36
            $region35: #{gnn_forward.5} parent=31 // pred_region
              // Predicated region
              $region48: #{gnn_forward.5} parent=35 // pred_check
                _
              $region49: #{gnn_forward.5} parent=35 // pred_check_branch
                %257 = sbr.rel (0) target = $region51
              $region50: #{gnn_forward.5} parent=35 // pred_region
                loop: start=0, step=1, limit=1
                $region52: #{gnn_forward.5} parent=50 // loop_pre_header
                  _
                $region53: #{gnn_forward.5} parent=50 // loop_header
                  %s259 = sphi 0, %s263
                  %p260 = scmp.ge.s32.totalorder %s259, 1
                  %s264 = sphi %s207, %s207
                  %s265 = sphi %s202, %s202
                $region54: #{gnn_forward.5} parent=50 // loop_header_branch
                  %262 = sbr.rel (%p260) target = $region58
                $region55: #{gnn_forward.5} parent=50 // loop_body
                  _
                $region56: #{gnn_forward.5} parent=50 // loop_footer
                  %s263 = sadd.s32 1, %s259
                $region57: #{gnn_forward.5} parent=50 // loop_footer_branch
                  %258 = sbr.rel target = $region53
                $region58: #{gnn_forward.5} parent=50 // loop_exit
                  _
                %s267 = ssub.s32 16, 1
                loop: start=0, step=1, limit=1
                $region59: #{gnn_forward.5} parent=50 // loop_pre_header
                  _
                $region60: #{gnn_forward.5} parent=50 // loop_header
                  %s269 = sphi 0, %s273
                  %p270 = scmp.ge.s32.totalorder %s269, 1
                  %s274 = sphi %s207, %s207
                  %s275 = sphi %s202, %s202
                $region61: #{gnn_forward.5} parent=50 // loop_header_branch
                  %272 = sbr.rel (%p270) target = $region65
                $region62: #{gnn_forward.5} parent=50 // loop_body
                  %v276 = vld [vmem:[%s274] sm:%s267]
                  %277 = vst [vmem:[%s275] sm:%s267] %v276
                  %v278 = vld [vmem:[%s274 + $0x8] sm:%s267]
                  %279 = vst [vmem:[%s275 + $0x4] sm:%s267] %v278
                  %v280 = vld [vmem:[%s274 + $0x10] sm:%s267]
                  %281 = vst [vmem:[%s275 + $0x8] sm:%s267] %v280
                  %v282 = vld [vmem:[%s274 + $0x18] sm:%s267]
                  %283 = vst [vmem:[%s275 + $0xc] sm:%s267] %v282
                  %v284 = vld [vmem:[%s274 + $0x20] sm:%s267]
                  %285 = vst [vmem:[%s275 + $0x10] sm:%s267] %v284
                  %v286 = vld [vmem:[%s274 + $0x28] sm:%s267]
                  %287 = vst [vmem:[%s275 + $0x14] sm:%s267] %v286
                  %v288 = vld [vmem:[%s274 + $0x30] sm:%s267]
                  %289 = vst [vmem:[%s275 + $0x18] sm:%s267] %v288
                  %v290 = vld [vmem:[%s274 + $0x38] sm:%s267]
                  %291 = vst [vmem:[%s275 + $0x1c] sm:%s267] %v290
                  %v292 = vld [vmem:[%s274 + $0x40] sm:%s267]
                  %293 = vst [vmem:[%s275 + $0x20] sm:%s267] %v292
                  %v294 = vld [vmem:[%s274 + $0x48] sm:%s267]
                  %295 = vst [vmem:[%s275 + $0x24] sm:%s267] %v294
                  %v296 = vld [vmem:[%s274 + $0x50] sm:%s267]
                  %297 = vst [vmem:[%s275 + $0x28] sm:%s267] %v296
                  %v298 = vld [vmem:[%s274 + $0x58] sm:%s267]
                  %299 = vst [vmem:[%s275 + $0x2c] sm:%s267] %v298
                  %v300 = vld [vmem:[%s274 + $0x60] sm:%s267]
                  %301 = vst [vmem:[%s275 + $0x30] sm:%s267] %v300
                  %v302 = vld [vmem:[%s274 + $0x68] sm:%s267]
                  %303 = vst [vmem:[%s275 + $0x34] sm:%s267] %v302
                  %v304 = vld [vmem:[%s274 + $0x70] sm:%s267]
                  %305 = vst [vmem:[%s275 + $0x38] sm:%s267] %v304
                  %v306 = vld [vmem:[%s274 + $0x78] sm:%s267]
                  %307 = vst [vmem:[%s275 + $0x3c] sm:%s267] %v306
                $region63: #{gnn_forward.5} parent=50 // loop_footer
                  %s273 = sadd.s32 1, %s269
                $region64: #{gnn_forward.5} parent=50 // loop_footer_branch
                  %268 = sbr.rel target = $region60
                $region65: #{gnn_forward.5} parent=50 // loop_exit
                  _
              $region51: #{gnn_forward.5} parent=35 // pred_fallthru
                _
            $region36: #{gnn_forward.5} parent=31 // pred_fallthru
              _
            // Predicated region
            $region37: #{gnn_forward.5} parent=31 // pred_check
              _
            $region38: #{gnn_forward.5} parent=31 // pred_check_branch
              %213 = sbr.rel (0) target = $region40
            $region39: #{gnn_forward.5} parent=31 // pred_region
              %s215 = ssub.s32 16, 1
              loop: start=0, step=1, limit=1
              $region41: #{gnn_forward.5} parent=39 // loop_pre_header
                _
              $region42: #{gnn_forward.5} parent=39 // loop_header
                %s217 = sphi 0, %s221
                %p218 = scmp.ge.s32.totalorder %s217, 1
                %s222 = sphi %s207, %s207
                %s223 = sphi %s202, %s202
              $region43: #{gnn_forward.5} parent=39 // loop_header_branch
                %220 = sbr.rel (%p218) target = $region47
              $region44: #{gnn_forward.5} parent=39 // loop_body
                %v224 = vld [vmem:[%s222] sm:%s215]
                %225 = vst [vmem:[%s223] sm:%s215] %v224
                %v226 = vld [vmem:[%s222 + $0x8] sm:%s215]
                %227 = vst [vmem:[%s223 + $0x4] sm:%s215] %v226
                %v228 = vld [vmem:[%s222 + $0x10] sm:%s215]
                %229 = vst [vmem:[%s223 + $0x8] sm:%s215] %v228
                %v230 = vld [vmem:[%s222 + $0x18] sm:%s215]
                %231 = vst [vmem:[%s223 + $0xc] sm:%s215] %v230
                %v232 = vld [vmem:[%s222 + $0x20] sm:%s215]
                %233 = vst [vmem:[%s223 + $0x10] sm:%s215] %v232
                %v234 = vld [vmem:[%s222 + $0x28] sm:%s215]
                %235 = vst [vmem:[%s223 + $0x14] sm:%s215] %v234
                %v236 = vld [vmem:[%s222 + $0x30] sm:%s215]
                %237 = vst [vmem:[%s223 + $0x18] sm:%s215] %v236
                %v238 = vld [vmem:[%s222 + $0x38] sm:%s215]
                %239 = vst [vmem:[%s223 + $0x1c] sm:%s215] %v238
                %v240 = vld [vmem:[%s222 + $0x40] sm:%s215]
                %241 = vst [vmem:[%s223 + $0x20] sm:%s215] %v240
                %v242 = vld [vmem:[%s222 + $0x48] sm:%s215]
                %243 = vst [vmem:[%s223 + $0x24] sm:%s215] %v242
                %v244 = vld [vmem:[%s222 + $0x50] sm:%s215]
                %245 = vst [vmem:[%s223 + $0x28] sm:%s215] %v244
                %v246 = vld [vmem:[%s222 + $0x58] sm:%s215]
                %247 = vst [vmem:[%s223 + $0x2c] sm:%s215] %v246
                %v248 = vld [vmem:[%s222 + $0x60] sm:%s215]
                %249 = vst [vmem:[%s223 + $0x30] sm:%s215] %v248
                %v250 = vld [vmem:[%s222 + $0x68] sm:%s215]
                %251 = vst [vmem:[%s223 + $0x34] sm:%s215] %v250
                %v252 = vld [vmem:[%s222 + $0x70] sm:%s215]
                %253 = vst [vmem:[%s223 + $0x38] sm:%s215] %v252
                %v254 = vld [vmem:[%s222 + $0x78] sm:%s215]
                %255 = vst [vmem:[%s223 + $0x3c] sm:%s215] %v254
              $region45: #{gnn_forward.5} parent=39 // loop_footer
                %s221 = sadd.s32 1, %s217
              $region46: #{gnn_forward.5} parent=39 // loop_footer_branch
                %216 = sbr.rel target = $region42
              $region47: #{gnn_forward.5} parent=39 // loop_exit
                _
            $region40: #{gnn_forward.5} parent=31 // pred_fallthru
              _
          $region32: #{gnn_forward.5} parent=27 // pred_fallthru
            _
          %308 = vnop
        $region28: #{gnn_forward.5} parent=23 // pred_fallthru
          _
        // Predicated region
        $region66: #{gnn_forward.5} parent=23 // pred_check
          %p309 = pneg %p71
        $region67: #{gnn_forward.5} parent=23 // pred_check_branch
          %311 = sbr.rel (%p309) target = $region69
        $region68: #{gnn_forward.5} parent=23 // pred_region
          %s312 = smul.u32 16, %s19
          %p313 = scmp.lt.s32.totalorder %s312, 31
          %s314 = scalar_select %p313, %s312, 31
          %s315 = smul.addr %s314, 4
          %s316 = scalar_lea.vmem %s1, %s315
          %s317 = smul.u32 16, %s19
        $region69: #{gnn_forward.5} parent=23 // pred_fallthru
          _
        // Predicated region
        $region70: #{gnn_forward.5} parent=23 // pred_check
          %p318 = pneg %p97
        $region71: #{gnn_forward.5} parent=23 // pred_check_branch
          %320 = sbr.rel (%p318) target = $region73
        $region72: #{gnn_forward.5} parent=23 // pred_region
          %s321 = smul.u32 16, %s18
          %p322 = scmp.lt.s32.totalorder %s321, 31
          %s323 = scalar_select %p322, %s321, 31
          %s324 = smul.addr %s323, 4
          %s325 = scalar_lea.vmem %s2, %s324
          %s326 = smul.u32 16, %s18
        $region73: #{gnn_forward.5} parent=23 // pred_fallthru
          _
      $region24: #{gnn_forward.5} parent=5 // pred_fallthru
        _
      %p327 = scmp.le.s32.totalorder 1, %s11
      %p328 = scmp.lt.s32.totalorder %s11, 5
      %p329 = pnand %p327, %p328
      %p330 = pneg %p329
      // Predicated region
      $region74: #{gnn_forward.5} parent=5 // pred_check
        _
      $region75: #{gnn_forward.5} parent=5 // pred_check_branch
        %332 = sbr.rel (%p329) target = $region77
      $region76: #{gnn_forward.5} parent=5 // pred_region
        %s333 = ssub.s32 %s11, 1
        %s334 = sand.u32 %s38, 1
        %s335 = sand.u32 %s38, 1
        %s336 = smul.addr %s335, 64
        %s337 = scalar_lea.vmem [#allocation3], %s336
        // Predicated region
        $region78: #{gnn_forward.5} parent=76 // pred_check
          %p338 = pneg %p51
        $region79: #{gnn_forward.5} parent=76 // pred_check_branch
          %340 = sbr.rel (%p338) target = $region81
        $region80: #{gnn_forward.5} parent=76 // pred_region
          _
        $region81: #{gnn_forward.5} parent=76 // pred_fallthru
          _
        %s341 = sand.u32 %s38, 1
        %s342 = sand.u32 %s38, 1
        %s343 = smul.addr %s342, 64
        %s344 = scalar_lea.vmem [#allocation3], %s343
        %p345 = pneg %p51
        %p346 = pneg %p48
        %s347 = smul.u32 16, %s21
        %p348 = scmp.lt.s32.totalorder %s347, 31
        %s349 = scalar_select %p348, %s347, 31
        %s350 = smul.addr %s349, 4
        %s351 = scalar_lea.vmem %s1, %s350
        %p352 = pneg %p77
        %p353 = pneg %p74
        %s354 = smul.u32 16, %s20
        %p355 = scmp.lt.s32.totalorder %s354, 31
        %s356 = scalar_select %p355, %s354, 31
        %s357 = smul.addr %s356, 4
        %s358 = scalar_lea.vmem %s2, %s357
        %p359 = pneg %p103
        %p360 = pneg %p100
        %p361 = pneg %p124
        %p362 = pneg %p121
        %p363 = pneg %p145
        %p364 = pneg %p142
        %p365 = pneg %p171
        %p366 = pneg %p168
        %s367 = smul.u32 16, %s20
        %p368 = scmp.lt.s32.totalorder %s367, 31
        %s369 = scalar_select %p368, %s367, 31
        %s370 = smul.addr %s369, 8
        %s371 = scalar_lea.vmem %s5, %s370
        %s372 = smul.u32 16, %s20
        %s373 = smul.u32 16, %s21
        %p374 = scmp.lt.s32.totalorder %s373, 31
        %s375 = scalar_select %p374, %s373, 31
        %s376 = smul.addr %s375, 4
        %s377 = scalar_lea.vmem %s1, %s376
        %s378 = smul.u32 16, %s21
        %s379 = smul.u32 16, %s20
        %p380 = scmp.lt.s32.totalorder %s379, 31
        %s381 = scalar_select %p380, %s379, 31
        %s382 = smul.addr %s381, 4
        %s383 = scalar_lea.vmem %s2, %s382
        %s384 = smul.u32 16, %s20
        %s385 = smul.u32 16, %s20
        %p386 = scmp.lt.s32.totalorder %s385, 31
        %s387 = scalar_select %p386, %s385, 31
        %s388 = smul.addr %s387, 8
        %s389 = scalar_lea.vmem %s5, %s388
        %s390 = smul.u32 16, %s20
        %p391 = scmp.eq.s32.totalorder %s21, 0
        // Predicated region
        $region82: #{gnn_forward.5} parent=76 // pred_check
          %p392 = pneg %p391
        $region83: #{gnn_forward.5} parent=76 // pred_check_branch
          %394 = sbr.rel (%p392) target = $region85
        $region84: #{gnn_forward.5} parent=76 // pred_region
          %395 = vst [vmem:[#allocation2] sm:$0xff] 0.0
          %396 = vst [vmem:[#allocation2 + $0x8] sm:$0xff] 0.0
          %397 = vst [vmem:[#allocation2 + $0x10] sm:$0xff] 0.0
          %398 = vst [vmem:[#allocation2 + $0x18] sm:$0xff] 0.0
          %399 = vst [vmem:[#allocation2 + $0x20] sm:$0xff] 0.0
          %400 = vst [vmem:[#allocation2 + $0x28] sm:$0xff] 0.0
          %401 = vst [vmem:[#allocation2 + $0x30] sm:$0xff] 0.0
          %402 = vst [vmem:[#allocation2 + $0x38] sm:$0xff] 0.0
          %403 = vst [vmem:[#allocation2 + $0x40] sm:$0xff] 0.0
          %404 = vst [vmem:[#allocation2 + $0x48] sm:$0xff] 0.0
          %405 = vst [vmem:[#allocation2 + $0x50] sm:$0xff] 0.0
          %406 = vst [vmem:[#allocation2 + $0x58] sm:$0xff] 0.0
          %407 = vst [vmem:[#allocation2 + $0x60] sm:$0xff] 0.0
          %408 = vst [vmem:[#allocation2 + $0x68] sm:$0xff] 0.0
          %409 = vst [vmem:[#allocation2 + $0x70] sm:$0xff] 0.0
          %410 = vst [vmem:[#allocation2 + $0x78] sm:$0xff] 0.0
        $region85: #{gnn_forward.5} parent=76 // pred_fallthru
          _
        %v411 = vld [vmem:[#allocation2] sm:$0xff]
        %v412 = vld [vmem:[#allocation2 + $0x8] sm:$0xff]
        %v413 = vld [vmem:[#allocation2 + $0x10] sm:$0xff]
        %v414 = vld [vmem:[#allocation2 + $0x18] sm:$0xff]
        %v415 = vld [vmem:[#allocation2 + $0x20] sm:$0xff]
        %v416 = vld [vmem:[#allocation2 + $0x28] sm:$0xff]
        %v417 = vld [vmem:[#allocation2 + $0x30] sm:$0xff]
        %v418 = vld [vmem:[#allocation2 + $0x38] sm:$0xff]
        %v419 = vld [vmem:[#allocation2 + $0x40] sm:$0xff]
        %v420 = vld [vmem:[#allocation2 + $0x48] sm:$0xff]
        %v421 = vld [vmem:[#allocation2 + $0x50] sm:$0xff]
        %v422 = vld [vmem:[#allocation2 + $0x58] sm:$0xff]
        %v423 = vld [vmem:[#allocation2 + $0x60] sm:$0xff]
        %v424 = vld [vmem:[#allocation2 + $0x68] sm:$0xff]
        %v425 = vld [vmem:[#allocation2 + $0x70] sm:$0xff]
        %v426 = vld [vmem:[#allocation2 + $0x78] sm:$0xff]
        %v427 = vld [vmem:[%s337] sm:$0xf]
        %v428 = vld [vmem:[%s337 + $0x4] sm:$0xf]
        %v429 = vld [vmem:[%s337 + $0x8] sm:$0xf]
        %v430 = vld [vmem:[%s337 + $0xc] sm:$0xf]
        %v431 = vld [vmem:[%s337 + $0x10] sm:$0xf]
        %v432 = vld [vmem:[%s337 + $0x14] sm:$0xf]
        %v433 = vld [vmem:[%s337 + $0x18] sm:$0xf]
        %v434 = vld [vmem:[%s337 + $0x1c] sm:$0xf]
        %v435 = vld [vmem:[%s337 + $0x20] sm:$0xf]
        %v436 = vld [vmem:[%s337 + $0x24] sm:$0xf]
        %v437 = vld [vmem:[%s337 + $0x28] sm:$0xf]
        %v438 = vld [vmem:[%s337 + $0x2c] sm:$0xf]
        %v439 = vld [vmem:[%s337 + $0x30] sm:$0xf]
        %v440 = vld [vmem:[%s337 + $0x34] sm:$0xf]
        %v441 = vld [vmem:[%s337 + $0x38] sm:$0xf]
        %v442 = vld [vmem:[%s337 + $0x3c] sm:$0xf]
        %v443 = vld [vmem:[%s377] sm:$0xf]
        %v444 = vld [vmem:[%s377 + $0x4] sm:$0xf]
        %v445 = vld [vmem:[%s377 + $0x8] sm:$0xf]
        %v446 = vld [vmem:[%s377 + $0xc] sm:$0xf]
        %v447 = vld [vmem:[%s377 + $0x10] sm:$0xf]
        %v448 = vld [vmem:[%s377 + $0x14] sm:$0xf]
        %v449 = vld [vmem:[%s377 + $0x18] sm:$0xf]
        %v450 = vld [vmem:[%s377 + $0x1c] sm:$0xf]
        %v451 = vld [vmem:[%s377 + $0x20] sm:$0xf]
        %v452 = vld [vmem:[%s377 + $0x24] sm:$0xf]
        %v453 = vld [vmem:[%s377 + $0x28] sm:$0xf]
        %v454 = vld [vmem:[%s377 + $0x2c] sm:$0xf]
        %v455 = vld [vmem:[%s377 + $0x30] sm:$0xf]
        %v456 = vld [vmem:[%s377 + $0x34] sm:$0xf]
        %v457 = vld [vmem:[%s377 + $0x38] sm:$0xf]
        %v458 = vld [vmem:[%s377 + $0x3c] sm:$0xf]
        %v475 = vunpack.c.l.b16 %v427
        %v476 = vunpack.c.l.b16 %v428
        %v477 = vunpack.c.l.b16 %v429
        %v478 = vunpack.c.l.b16 %v430
        %v479 = vunpack.c.l.b16 %v431
        %v480 = vunpack.c.l.b16 %v432
        %v481 = vunpack.c.l.b16 %v433
        %v482 = vunpack.c.l.b16 %v434
        %v483 = vunpack.c.l.b16 %v435
        %v484 = vunpack.c.l.b16 %v436
        %v485 = vunpack.c.l.b16 %v437
        %v486 = vunpack.c.l.b16 %v438
        %v487 = vunpack.c.l.b16 %v439
        %v488 = vunpack.c.l.b16 %v440
        %v489 = vunpack.c.l.b16 %v441
        %v490 = vunpack.c.l.b16 %v442
        %v491 = vpack.c.b16 %v476, %v475
        %v492 = vpack.c.b16 %v478, %v477
        %v493 = vpack.c.b16 %v480, %v479
        %v494 = vpack.c.b16 %v482, %v481
        %v495 = vpack.c.b16 %v484, %v483
        %v496 = vpack.c.b16 %v486, %v485
        %v497 = vpack.c.b16 %v488, %v487
        %v498 = vpack.c.b16 %v490, %v489
        %v523 = vunpack.c.l.b16 %v443
        %v524 = vunpack.c.l.b16 %v444
        %v525 = vunpack.c.l.b16 %v445
        %v526 = vunpack.c.l.b16 %v446
        %v527 = vunpack.c.l.b16 %v447
        %v528 = vunpack.c.l.b16 %v448
        %v529 = vunpack.c.l.b16 %v449
        %v530 = vunpack.c.l.b16 %v450
        %v531 = vunpack.c.l.b16 %v451
        %v532 = vunpack.c.l.b16 %v452
        %v533 = vunpack.c.l.b16 %v453
        %v534 = vunpack.c.l.b16 %v454
        %v535 = vunpack.c.l.b16 %v455
        %v536 = vunpack.c.l.b16 %v456
        %v537 = vunpack.c.l.b16 %v457
        %v538 = vunpack.c.l.b16 %v458
        %v539 = vpack.c.b16 %v524, %v523
        %v540 = vpack.c.b16 %v526, %v525
        %v541 = vpack.c.b16 %v528, %v527
        %v542 = vpack.c.b16 %v530, %v529
        %v543 = vpack.c.b16 %v532, %v531
        %v544 = vpack.c.b16 %v534, %v533
        %v545 = vpack.c.b16 %v536, %v535
        %v546 = vpack.c.b16 %v538, %v537
        %555 = vmatpush.bf16.msra.mxu0 %v546
        %556 = vmatpush.bf16.msra.mxu0 %v545
        %557 = vmatpush.bf16.msra.mxu0 %v544
        %558 = vmatpush.bf16.msra.mxu0 %v543
        %559 = vmatpush.bf16.msra.mxu0 %v542
        %560 = vmatpush.bf16.msra.mxu0 %v541
        %561 = vmatpush.bf16.msra.mxu0 %v540
        %562 = vmatpush.bf16.msra.mxu0 %v539
        %563 = vmatmul.bf16.gmra.mxu0 %v491
        %v564 = vpop.f32.mrf.mxu0
        %v565 = vadd.f32 0.0, %v564
        %v566 = vpop.f32.mrf.mxu0
        %v567 = vadd.f32 0.0, %v566
        %568 = vmatmul.bf16.gmra.mxu0 %v492
        %v569 = vpop.f32.mrf.mxu0
        %v570 = vadd.f32 0.0, %v569
        %v571 = vpop.f32.mrf.mxu0
        %v572 = vadd.f32 0.0, %v571
        %573 = vmatmul.bf16.gmra.mxu0 %v493
        %v574 = vpop.f32.mrf.mxu0
        %v575 = vadd.f32 0.0, %v574
        %v576 = vpop.f32.mrf.mxu0
        %v577 = vadd.f32 0.0, %v576
        %578 = vmatmul.bf16.gmra.mxu0 %v494
        %v579 = vpop.f32.mrf.mxu0
        %v580 = vadd.f32 0.0, %v579
        %v581 = vpop.f32.mrf.mxu0
        %v582 = vadd.f32 0.0, %v581
        %583 = vmatmul.bf16.gmra.mxu0 %v495
        %v584 = vpop.f32.mrf.mxu0
        %v585 = vadd.f32 0.0, %v584
        %v586 = vpop.f32.mrf.mxu0
        %v587 = vadd.f32 0.0, %v586
        %588 = vmatmul.bf16.gmra.mxu0 %v496
        %v589 = vpop.f32.mrf.mxu0
        %v590 = vadd.f32 0.0, %v589
        %v591 = vpop.f32.mrf.mxu0
        %v592 = vadd.f32 0.0, %v591
        %593 = vmatmul.bf16.gmra.mxu0 %v497
        %v594 = vpop.f32.mrf.mxu0
        %v595 = vadd.f32 0.0, %v594
        %v596 = vpop.f32.mrf.mxu0
        %v597 = vadd.f32 0.0, %v596
        %598 = vmatmul.bf16.gmra.mxu0 %v498
        %v599 = vpop.f32.mrf.mxu0
        %v600 = vadd.f32 0.0, %v599
        %v601 = vpop.f32.mrf.mxu0
        %v602 = vadd.f32 0.0, %v601
        %603 = vdwg.mxu0
        %v604 = vadd.f32 %v411, %v565
        %v605 = vadd.f32 %v412, %v567
        %v606 = vadd.f32 %v413, %v570
        %v607 = vadd.f32 %v414, %v572
        %v608 = vadd.f32 %v415, %v575
        %v609 = vadd.f32 %v416, %v577
        %v610 = vadd.f32 %v417, %v580
        %v611 = vadd.f32 %v418, %v582
        %v612 = vadd.f32 %v419, %v585
        %v613 = vadd.f32 %v420, %v587
        %v614 = vadd.f32 %v421, %v590
        %v615 = vadd.f32 %v422, %v592
        %v616 = vadd.f32 %v423, %v595
        %v617 = vadd.f32 %v424, %v597
        %v618 = vadd.f32 %v425, %v600
        %v619 = vadd.f32 %v426, %v602
        %620 = vst [vmem:[#allocation2] sm:$0xff] %v604
        %621 = vst [vmem:[#allocation2 + $0x8] sm:$0xff] %v605
        %622 = vst [vmem:[#allocation2 + $0x10] sm:$0xff] %v606
        %623 = vst [vmem:[#allocation2 + $0x18] sm:$0xff] %v607
        %624 = vst [vmem:[#allocation2 + $0x20] sm:$0xff] %v608
        %625 = vst [vmem:[#allocation2 + $0x28] sm:$0xff] %v609
        %626 = vst [vmem:[#allocation2 + $0x30] sm:$0xff] %v610
        %627 = vst [vmem:[#allocation2 + $0x38] sm:$0xff] %v611
        %628 = vst [vmem:[#allocation2 + $0x40] sm:$0xff] %v612
        %629 = vst [vmem:[#allocation2 + $0x48] sm:$0xff] %v613
        %630 = vst [vmem:[#allocation2 + $0x50] sm:$0xff] %v614
        %631 = vst [vmem:[#allocation2 + $0x58] sm:$0xff] %v615
        %632 = vst [vmem:[#allocation2 + $0x60] sm:$0xff] %v616
        %633 = vst [vmem:[#allocation2 + $0x68] sm:$0xff] %v617
        %634 = vst [vmem:[#allocation2 + $0x70] sm:$0xff] %v618
        %635 = vst [vmem:[#allocation2 + $0x78] sm:$0xff] %v619
        %p636 = scmp.eq.s32.totalorder %s21, 1
        // Predicated region
        $region86: #{gnn_forward.5} parent=76 // pred_check
          %p637 = pneg %p636
        $region87: #{gnn_forward.5} parent=76 // pred_check_branch
          %639 = sbr.rel (%p637) target = $region89
        $region88: #{gnn_forward.5} parent=76 // pred_region
          %v640 = vld [vmem:[#allocation2] sm:$0xff]
          %v641 = vld [vmem:[#allocation2 + $0x8] sm:$0xff]
          %v642 = vld [vmem:[#allocation2 + $0x10] sm:$0xff]
          %v643 = vld [vmem:[#allocation2 + $0x18] sm:$0xff]
          %v644 = vld [vmem:[#allocation2 + $0x20] sm:$0xff]
          %v645 = vld [vmem:[#allocation2 + $0x28] sm:$0xff]
          %v646 = vld [vmem:[#allocation2 + $0x30] sm:$0xff]
          %v647 = vld [vmem:[#allocation2 + $0x38] sm:$0xff]
          %v648 = vld [vmem:[#allocation2 + $0x40] sm:$0xff]
          %v649 = vld [vmem:[#allocation2 + $0x48] sm:$0xff]
          %v650 = vld [vmem:[#allocation2 + $0x50] sm:$0xff]
          %v651 = vld [vmem:[#allocation2 + $0x58] sm:$0xff]
          %v652 = vld [vmem:[#allocation2 + $0x60] sm:$0xff]
          %v653 = vld [vmem:[#allocation2 + $0x68] sm:$0xff]
          %v654 = vld [vmem:[#allocation2 + $0x70] sm:$0xff]
          %v655 = vld [vmem:[#allocation2 + $0x78] sm:$0xff]
          %v656 = vpack.c.bf16 %v640, %v640
          %v657 = vpack.c.bf16 %v641, %v641
          %v658 = vpack.c.bf16 %v642, %v642
          %v659 = vpack.c.bf16 %v643, %v643
          %v660 = vpack.c.bf16 %v644, %v644
          %v661 = vpack.c.bf16 %v645, %v645
          %v662 = vpack.c.bf16 %v646, %v646
          %v663 = vpack.c.bf16 %v647, %v647
          %v664 = vpack.c.bf16 %v648, %v648
          %v665 = vpack.c.bf16 %v649, %v649
          %v666 = vpack.c.bf16 %v650, %v650
          %v667 = vpack.c.bf16 %v651, %v651
          %v668 = vpack.c.bf16 %v652, %v652
          %v669 = vpack.c.bf16 %v653, %v653
          %v670 = vpack.c.bf16 %v654, %v654
          %v671 = vpack.c.bf16 %v655, %v655
          %v672 = vld [vmem:[%s383] sm:$0xf]
          %v673 = vld [vmem:[%s383 + $0x4] sm:$0xf]
          %v674 = vld [vmem:[%s383 + $0x8] sm:$0xf]
          %v675 = vld [vmem:[%s383 + $0xc] sm:$0xf]
          %v676 = vld [vmem:[%s383 + $0x10] sm:$0xf]
          %v677 = vld [vmem:[%s383 + $0x14] sm:$0xf]
          %v678 = vld [vmem:[%s383 + $0x18] sm:$0xf]
          %v679 = vld [vmem:[%s383 + $0x1c] sm:$0xf]
          %v680 = vld [vmem:[%s383 + $0x20] sm:$0xf]
          %v681 = vld [vmem:[%s383 + $0x24] sm:$0xf]
          %v682 = vld [vmem:[%s383 + $0x28] sm:$0xf]
          %v683 = vld [vmem:[%s383 + $0x2c] sm:$0xf]
          %v684 = vld [vmem:[%s383 + $0x30] sm:$0xf]
          %v685 = vld [vmem:[%s383 + $0x34] sm:$0xf]
          %v686 = vld [vmem:[%s383 + $0x38] sm:$0xf]
          %v687 = vld [vmem:[%s383 + $0x3c] sm:$0xf]
          %v704 = vunpack.c.l.b16 %v656
          %v705 = vunpack.c.l.b16 %v657
          %v706 = vunpack.c.l.b16 %v658
          %v707 = vunpack.c.l.b16 %v659
          %v708 = vunpack.c.l.b16 %v660
          %v709 = vunpack.c.l.b16 %v661
          %v710 = vunpack.c.l.b16 %v662
          %v711 = vunpack.c.l.b16 %v663
          %v712 = vunpack.c.l.b16 %v664
          %v713 = vunpack.c.l.b16 %v665
          %v714 = vunpack.c.l.b16 %v666
          %v715 = vunpack.c.l.b16 %v667
          %v716 = vunpack.c.l.b16 %v668
          %v717 = vunpack.c.l.b16 %v669
          %v718 = vunpack.c.l.b16 %v670
          %v719 = vunpack.c.l.b16 %v671
          %v720 = vpack.c.b16 %v705, %v704
          %v721 = vpack.c.b16 %v707, %v706
          %v722 = vpack.c.b16 %v709, %v708
          %v723 = vpack.c.b16 %v711, %v710
          %v724 = vpack.c.b16 %v713, %v712
          %v725 = vpack.c.b16 %v715, %v714
          %v726 = vpack.c.b16 %v717, %v716
          %v727 = vpack.c.b16 %v719, %v718
          %v752 = vunpack.c.l.b16 %v672
          %v753 = vunpack.c.l.b16 %v673
          %v754 = vunpack.c.l.b16 %v674
          %v755 = vunpack.c.l.b16 %v675
          %v756 = vunpack.c.l.b16 %v676
          %v757 = vunpack.c.l.b16 %v677
          %v758 = vunpack.c.l.b16 %v678
          %v759 = vunpack.c.l.b16 %v679
          %v760 = vunpack.c.l.b16 %v680
          %v761 = vunpack.c.l.b16 %v681
          %v762 = vunpack.c.l.b16 %v682
          %v763 = vunpack.c.l.b16 %v683
          %v764 = vunpack.c.l.b16 %v684
          %v765 = vunpack.c.l.b16 %v685
          %v766 = vunpack.c.l.b16 %v686
          %v767 = vunpack.c.l.b16 %v687
          %v768 = vpack.c.b16 %v753, %v752
          %v769 = vpack.c.b16 %v755, %v754
          %v770 = vpack.c.b16 %v757, %v756
          %v771 = vpack.c.b16 %v759, %v758
          %v772 = vpack.c.b16 %v761, %v760
          %v773 = vpack.c.b16 %v763, %v762
          %v774 = vpack.c.b16 %v765, %v764
          %v775 = vpack.c.b16 %v767, %v766
          %v784 = vld [vmem:[%s3] sm:$0xf]
          %v785 = vld [vmem:[%s3 + $0x4] sm:$0xf]
          %v786 = vld [vmem:[%s3 + $0x8] sm:$0xf]
          %v787 = vld [vmem:[%s3 + $0xc] sm:$0xf]
          %v788 = vld [vmem:[%s3 + $0x10] sm:$0xf]
          %v789 = vld [vmem:[%s3 + $0x14] sm:$0xf]
          %v790 = vld [vmem:[%s3 + $0x18] sm:$0xf]
          %v791 = vld [vmem:[%s3 + $0x1c] sm:$0xf]
          %v792 = vld [vmem:[%s3 + $0x20] sm:$0xf]
          %v793 = vld [vmem:[%s3 + $0x24] sm:$0xf]
          %v794 = vld [vmem:[%s3 + $0x28] sm:$0xf]
          %v795 = vld [vmem:[%s3 + $0x2c] sm:$0xf]
          %v796 = vld [vmem:[%s3 + $0x30] sm:$0xf]
          %v797 = vld [vmem:[%s3 + $0x34] sm:$0xf]
          %v798 = vld [vmem:[%s3 + $0x38] sm:$0xf]
          %v799 = vld [vmem:[%s3 + $0x3c] sm:$0xf]
          %v800 = vld [vmem:[%s3 + $0x40] sm:$0xf]
          %v801 = vld [vmem:[%s3 + $0x44] sm:$0xf]
          %v802 = vld [vmem:[%s3 + $0x48] sm:$0xf]
          %v803 = vld [vmem:[%s3 + $0x4c] sm:$0xf]
          %v804 = vld [vmem:[%s3 + $0x50] sm:$0xf]
          %v805 = vld [vmem:[%s3 + $0x54] sm:$0xf]
          %v806 = vld [vmem:[%s3 + $0x58] sm:$0xf]
          %v807 = vld [vmem:[%s3 + $0x5c] sm:$0xf]
          %v808 = vld [vmem:[%s3 + $0x60] sm:$0xf]
          %v809 = vld [vmem:[%s3 + $0x64] sm:$0xf]
          %v810 = vld [vmem:[%s3 + $0x68] sm:$0xf]
          %v811 = vld [vmem:[%s3 + $0x6c] sm:$0xf]
          %v812 = vld [vmem:[%s3 + $0x70] sm:$0xf]
          %v813 = vld [vmem:[%s3 + $0x74] sm:$0xf]
          %v814 = vld [vmem:[%s3 + $0x78] sm:$0xf]
          %v815 = vld [vmem:[%s3 + $0x7c] sm:$0xf]
          %v816 = vld [vmem:[%s4] sm:$0x1]
          %v818 = vperm.slane %v816, 0
          %v852 = vunpack.c.l.b16 %v784
          %v853 = vunpack.c.l.b16 %v785
          %v854 = vunpack.c.l.b16 %v786
          %v855 = vunpack.c.l.b16 %v787
          %v856 = vunpack.c.l.b16 %v788
          %v857 = vunpack.c.l.b16 %v789
          %v858 = vunpack.c.l.b16 %v790
          %v859 = vunpack.c.l.b16 %v791
          %v860 = vunpack.c.l.b16 %v792
          %v861 = vunpack.c.l.b16 %v793
          %v862 = vunpack.c.l.b16 %v794
          %v863 = vunpack.c.l.b16 %v795
          %v864 = vunpack.c.l.b16 %v796
          %v865 = vunpack.c.l.b16 %v797
          %v866 = vunpack.c.l.b16 %v798
          %v867 = vunpack.c.l.b16 %v799
          %v868 = vunpack.c.l.b16 %v800
          %v869 = vunpack.c.l.b16 %v801
          %v870 = vunpack.c.l.b16 %v802
          %v871 = vunpack.c.l.b16 %v803
          %v872 = vunpack.c.l.b16 %v804
          %v873 = vunpack.c.l.b16 %v805
          %v874 = vunpack.c.l.b16 %v806
          %v875 = vunpack.c.l.b16 %v807
          %v876 = vunpack.c.l.b16 %v808
          %v877 = vunpack.c.l.b16 %v809
          %v878 = vunpack.c.l.b16 %v810
          %v879 = vunpack.c.l.b16 %v811
          %v880 = vunpack.c.l.b16 %v812
          %v881 = vunpack.c.l.b16 %v813
          %v882 = vunpack.c.l.b16 %v814
          %v883 = vunpack.c.l.b16 %v815
          %v884 = vpack.c.b16 %v853, %v852
          %v885 = vpack.c.b16 %v855, %v854
          %v886 = vpack.c.b16 %v857, %v856
          %v887 = vpack.c.b16 %v859, %v858
          %v888 = vpack.c.b16 %v861, %v860
          %v889 = vpack.c.b16 %v863, %v862
          %v890 = vpack.c.b16 %v865, %v864
          %v891 = vpack.c.b16 %v867, %v866
          %v892 = vpack.c.b16 %v869, %v868
          %v893 = vpack.c.b16 %v871, %v870
          %v894 = vpack.c.b16 %v873, %v872
          %v895 = vpack.c.b16 %v875, %v874
          %v896 = vpack.c.b16 %v877, %v876
          %v897 = vpack.c.b16 %v879, %v878
          %v898 = vpack.c.b16 %v881, %v880
          %v899 = vpack.c.b16 %v883, %v882
          %916 = vmatpush.bf16.msra.mxu0 %v891
          %917 = vmatpush.bf16.msra.mxu0 %v890
          %918 = vmatpush.bf16.msra.mxu0 %v889
          %919 = vmatpush.bf16.msra.mxu0 %v888
          %920 = vmatpush.bf16.msra.mxu0 %v887
          %921 = vmatpush.bf16.msra.mxu0 %v886
          %922 = vmatpush.bf16.msra.mxu0 %v885
          %923 = vmatpush.bf16.msra.mxu0 %v884
          %924 = vmatmul.bf16.gmra.mxu0 %v720
          %v925 = vpop.f32.mrf.mxu0
          %v926 = vadd.f32 %v818, %v925
          %v927 = vpop.f32.mrf.mxu0
          %v928 = vadd.f32 %v818, %v927
          %929 = vmatmul.bf16.gmra.mxu0 %v721
          %v930 = vpop.f32.mrf.mxu0
          %v931 = vadd.f32 %v818, %v930
          %v932 = vpop.f32.mrf.mxu0
          %v933 = vadd.f32 %v818, %v932
          %934 = vmatmul.bf16.gmra.mxu0 %v722
          %v935 = vpop.f32.mrf.mxu0
          %v936 = vadd.f32 %v818, %v935
          %v937 = vpop.f32.mrf.mxu0
          %v938 = vadd.f32 %v818, %v937
          %939 = vmatmul.bf16.gmra.mxu0 %v723
          %v940 = vpop.f32.mrf.mxu0
          %v941 = vadd.f32 %v818, %v940
          %v942 = vpop.f32.mrf.mxu0
          %v943 = vadd.f32 %v818, %v942
          %944 = vmatmul.bf16.gmra.mxu0 %v724
          %v945 = vpop.f32.mrf.mxu0
          %v946 = vadd.f32 %v818, %v945
          %v947 = vpop.f32.mrf.mxu0
          %v948 = vadd.f32 %v818, %v947
          %949 = vmatmul.bf16.gmra.mxu0 %v725
          %v950 = vpop.f32.mrf.mxu0
          %v951 = vadd.f32 %v818, %v950
          %v952 = vpop.f32.mrf.mxu0
          %v953 = vadd.f32 %v818, %v952
          %954 = vmatmul.bf16.gmra.mxu0 %v726
          %v955 = vpop.f32.mrf.mxu0
          %v956 = vadd.f32 %v818, %v955
          %v957 = vpop.f32.mrf.mxu0
          %v958 = vadd.f32 %v818, %v957
          %959 = vmatmul.bf16.gmra.mxu0 %v727
          %v960 = vpop.f32.mrf.mxu0
          %v961 = vadd.f32 %v818, %v960
          %v962 = vpop.f32.mrf.mxu0
          %v963 = vadd.f32 %v818, %v962
          %964 = vdwg.mxu0
          %965 = vmatpush.bf16.msra.mxu0 %v899
          %966 = vmatpush.bf16.msra.mxu0 %v898
          %967 = vmatpush.bf16.msra.mxu0 %v897
          %968 = vmatpush.bf16.msra.mxu0 %v896
          %969 = vmatpush.bf16.msra.mxu0 %v895
          %970 = vmatpush.bf16.msra.mxu0 %v894
          %971 = vmatpush.bf16.msra.mxu0 %v893
          %972 = vmatpush.bf16.msra.mxu0 %v892
          %973 = vmatmul.bf16.gmra.mxu0 %v768
          %v974 = vpop.f32.mrf.mxu0
          %v975 = vadd.f32 %v926, %v974
          %v976 = vpop.f32.mrf.mxu0
          %v977 = vadd.f32 %v928, %v976
          %978 = vmatmul.bf16.gmra.mxu0 %v769
          %v979 = vpop.f32.mrf.mxu0
          %v980 = vadd.f32 %v931, %v979
          %v981 = vpop.f32.mrf.mxu0
          %v982 = vadd.f32 %v933, %v981
          %983 = vmatmul.bf16.gmra.mxu0 %v770
          %v984 = vpop.f32.mrf.mxu0
          %v985 = vadd.f32 %v936, %v984
          %v986 = vpop.f32.mrf.mxu0
          %v987 = vadd.f32 %v938, %v986
          %988 = vmatmul.bf16.gmra.mxu0 %v771
          %v989 = vpop.f32.mrf.mxu0
          %v990 = vadd.f32 %v941, %v989
          %v991 = vpop.f32.mrf.mxu0
          %v992 = vadd.f32 %v943, %v991
          %993 = vmatmul.bf16.gmra.mxu0 %v772
          %v994 = vpop.f32.mrf.mxu0
          %v995 = vadd.f32 %v946, %v994
          %v996 = vpop.f32.mrf.mxu0
          %v997 = vadd.f32 %v948, %v996
          %998 = vmatmul.bf16.gmra.mxu0 %v773
          %v999 = vpop.f32.mrf.mxu0
          %v1000 = vadd.f32 %v951, %v999
          %v1001 = vpop.f32.mrf.mxu0
          %v1002 = vadd.f32 %v953, %v1001
          %1003 = vmatmul.bf16.gmra.mxu0 %v774
          %v1004 = vpop.f32.mrf.mxu0
          %v1005 = vadd.f32 %v956, %v1004
          %v1006 = vpop.f32.mrf.mxu0
          %v1007 = vadd.f32 %v958, %v1006
          %1008 = vmatmul.bf16.gmra.mxu0 %v775
          %v1009 = vpop.f32.mrf.mxu0
          %v1010 = vadd.f32 %v961, %v1009
          %v1011 = vpop.f32.mrf.mxu0
          %v1012 = vadd.f32 %v963, %v1011
          %1013 = vdwg.mxu0
          %1014 = vst [vmem:[%s389] sm:$0xff] %v975
          %1015 = vst [vmem:[%s389 + $0x8] sm:$0xff] %v977
          %1016 = vst [vmem:[%s389 + $0x10] sm:$0xff] %v980
          %1017 = vst [vmem:[%s389 + $0x18] sm:$0xff] %v982
          %1018 = vst [vmem:[%s389 + $0x20] sm:$0xff] %v985
          %1019 = vst [vmem:[%s389 + $0x28] sm:$0xff] %v987
          %1020 = vst [vmem:[%s389 + $0x30] sm:$0xff] %v990
          %1021 = vst [vmem:[%s389 + $0x38] sm:$0xff] %v992
          %1022 = vst [vmem:[%s389 + $0x40] sm:$0xff] %v995
          %1023 = vst [vmem:[%s389 + $0x48] sm:$0xff] %v997
          %1024 = vst [vmem:[%s389 + $0x50] sm:$0xff] %v1000
          %1025 = vst [vmem:[%s389 + $0x58] sm:$0xff] %v1002
          %1026 = vst [vmem:[%s389 + $0x60] sm:$0xff] %v1005
          %1027 = vst [vmem:[%s389 + $0x68] sm:$0xff] %v1007
          %1028 = vst [vmem:[%s389 + $0x70] sm:$0xff] %v1010
          %1029 = vst [vmem:[%s389 + $0x78] sm:$0xff] %v1012
        $region89: #{gnn_forward.5} parent=76 // pred_fallthru
          _
        %s1030 = smul.u32 16, %s20
        %p1031 = scmp.lt.s32.totalorder %s1030, 31
        %s1032 = scalar_select %p1031, %s1030, 31
        %s1033 = smul.addr %s1032, 8
        %s1034 = scalar_lea.vmem %s5, %s1033
        // Predicated region
        $region90: #{gnn_forward.5} parent=76 // pred_check
          %p1035 = pneg %p168
        $region91: #{gnn_forward.5} parent=76 // pred_check_branch
          %1037 = sbr.rel (%p1035) target = $region93
        $region92: #{gnn_forward.5} parent=76 // pred_region
          %s1038 = smul.u32 16, %s20
        $region93: #{gnn_forward.5} parent=76 // pred_fallthru
          _
      $region77: #{gnn_forward.5} parent=5 // pred_fallthru
        _
      %p1039 = scmp.le.s32.totalorder 2, %s11
      // Predicated region
      $region94: #{gnn_forward.5} parent=5 // pred_check
        %p1040 = pneg %p1039
      $region95: #{gnn_forward.5} parent=5 // pred_check_branch
        %1042 = sbr.rel (%p1040) target = $region97
      $region96: #{gnn_forward.5} parent=5 // pred_region
        %s1043 = ssub.s32 %s11, 2
        // Predicated region
        $region98: #{gnn_forward.5} parent=96 // pred_check
          %p1044 = pneg %p174
        $region99: #{gnn_forward.5} parent=96 // pred_check_branch
          %1046 = sbr.rel (%p1044) target = $region101
        $region100: #{gnn_forward.5} parent=96 // pred_region
          %s1047 = smul.u32 16, %s22
          %p1048 = scmp.lt.s32.totalorder %s1047, 31
          %s1049 = scalar_select %p1048, %s1047, 31
          %s1050 = smul.addr %s1049, 8
          %s1051 = scalar_lea.vmem %s5, %s1050
        $region101: #{gnn_forward.5} parent=96 // pred_fallthru
          _
      $region97: #{gnn_forward.5} parent=5 // pred_fallthru
        _
    $region6: #{gnn_forward.5} parent=1 // loop_footer
      %s15 = sadd.s32 1, %s11
    $region7: #{gnn_forward.5} parent=1 // loop_footer_branch
      %10 = sbr.rel target = $region3
    $region8: #{gnn_forward.5} parent=1 // loop_exit
      _

</llo_original>
